<compile_context>
chip_gen: v6e
topology: v6e:2x2x1
jax: 0.10.0
libtpu: 0.0.40
codegen_flags: <defaults>
</compile_context>

<pallas_src>
import jax
import jax.numpy as jnp
from jax import lax
from jax.experimental import pallas as pl
from jax.experimental.pallas import tpu as pltpu


def conv3x3_kernel(x_ref, halo0_ref, halo1_ref, w_ref, b_ref, o_ref,
                   slab_ref, acc_ref):
    """One (batch, row-block) step of a 3x3 'same' convolution in NHWC.

    x_ref     : (1, TH, W+2, Cin)  padded rows [j*TH, j*TH+TH)
    halo0_ref : (1, 1,  W+2, Cin)  padded row  j*TH+TH
    halo1_ref : (1, 1,  W+2, Cin)  padded row  j*TH+TH+1
    w_ref     : (9, Cin, Cout)     one (Cin, Cout) matrix per kernel tap
    b_ref     : (1, 1, Cout)       bias (f32)
    o_ref     : (1, TH, W, Cout)   output rows [j*TH, j*TH+TH)
    slab_ref  : VMEM (TH+2, W+2, Cin) scratch — halo slab for this block
    acc_ref   : VMEM (TH, W, Cout) f32 scratch — accumulator
    """
    TH = x_ref.shape[1]
    Wp = x_ref.shape[2]
    W = Wp - 2

    # Assemble the (TH+2)-row halo slab once (two tiny extra copies instead of
    # nine near-full-size slab copies as before).
    slab_ref[pl.ds(0, TH), :, :] = x_ref[0]
    slab_ref[pl.ds(TH, 1), :, :] = halo0_ref[0]
    slab_ref[pl.ds(TH + 1, 1), :, :] = halo1_ref[0]

    acc_ref[...] = jnp.zeros_like(acc_ref)

    # Load the slab once; kx shifts are views of this single value (hoisted
    # over ky), ky shifts are cheap leading-dim slices.
    slab = slab_ref[...]                       # (TH+2, W+2, Cin), native dtype
    for kx in range(3):
        xs = slab[:, kx:kx + W, :]             # (TH+2, W, Cin)
        for ky in range(3):
            # MXU matmul: operands in native dtype (bf16-ready), f32 accum.
            acc_ref[...] += lax.dot_general(
                xs[ky:ky + TH],                # (TH, W, Cin)
                w_ref[ky * 3 + kx],            # (Cin, Cout)
                dimension_numbers=(((2,), (0,)), ((), ())),
                preferred_element_type=jnp.float32,
            )

    o_ref[0] = (acc_ref[...] + b_ref[...]).astype(o_ref.dtype)


_ROW_TILE_CANDIDATES = (256, 128, 64, 32, 16, 8)
# Conservative per-step working-set budget: leaves headroom for double
# buffering inside v7x's 64 MiB/TC VMEM (plenty on v5e/v6e's 128 MiB).
_VMEM_BUDGET_BYTES = 12 * 1024 * 1024


def _pick_row_tile(H, Wp, Cin, Cout, itemsize):
    """Largest row tile TH that divides H and fits the VMEM budget, preferring
    >= 2 row blocks so the row axis actually pipelines / shards across cores."""
    W = Wp - 2

    def working_set(th):
        main_in = th * Wp * Cin * itemsize
        halo_in = 2 * Wp * Cin * itemsize
        out_blk = th * W * Cout * itemsize
        slab = (th + 2) * Wp * Cin * itemsize
        acc = th * W * Cout * 4
        # Pallas double-buffers every pipelined block (2x); scratch is single.
        return 2 * (main_in + halo_in + out_blk) + slab + acc

    divisors = [t for t in _ROW_TILE_CANDIDATES if H % t == 0]
    if not divisors:
        return H                               # full-height block (always legal)
    fitting = [t for t in divisors if working_set(t) <= _VMEM_BUDGET_BYTES]
    multi = [t for t in fitting if H // t >= 2]
    if multi:
        return multi[0]
    if fitting:
        return fitting[0]
    return divisors[-1]                        # best effort: smallest divisor


@jax.jit
def _conv3x3_bias(x_nchw, weight, bias):
    N, Cin, H, W = x_nchw.shape
    Cout = weight.shape[0]
    Wp = W + 2
    itemsize = x_nchw.dtype.itemsize

    # Glue: NCHW interface -> NHWC compute layout + 1-px zero pad.  Under jit
    # XLA fuses the transpose into the pad copy (one HBM round trip).
    # TODO(synk): keep the surrounding model NHWC end-to-end to drop this.
    x_nhwc = jnp.transpose(x_nchw, (0, 2, 3, 1))
    x_pad = jnp.pad(x_nhwc, ((0, 0), (1, 1), (1, 1), (0, 0)))
    w_taps = jnp.transpose(weight, (2, 3, 1, 0)).reshape(9, Cin, Cout)
    w_taps = w_taps.astype(x_nchw.dtype)       # feed MXU in the input dtype
    b3 = bias.reshape(1, 1, Cout).astype(jnp.float32)

    TH = _pick_row_tile(H, Wp, Cin, Cout, itemsize)
    nblk = H // TH
    grid = (N, nblk)

    x_spec = pl.BlockSpec((1, TH, Wp, Cin), lambda n, j: (n, j, 0, 0))
    # 1-row halo specs: with block size 1 on H, block index == padded-row index.
    halo0_spec = pl.BlockSpec((1, 1, Wp, Cin),
                              lambda n, j: (n, j * TH + TH, 0, 0))
    halo1_spec = pl.BlockSpec((1, 1, Wp, Cin),
                              lambda n, j: (n, j * TH + TH + 1, 0, 0))
    # Weights / bias: same (whole-array) block every step -> fetched once.
    w_spec = pl.BlockSpec((9, Cin, Cout), lambda n, j: (0, 0, 0))
    b_spec = pl.BlockSpec((1, 1, Cout), lambda n, j: (0, 0, 0))
    out_spec = pl.BlockSpec((1, TH, W, Cout), lambda n, j: (n, j, 0, 0))

    flops = 2 * N * H * W * 9 * Cin * Cout
    bytes_accessed = (N * (H + 2) * Wp * Cin * itemsize
                      + 9 * Cin * Cout * itemsize
                      + Cout * 4
                      + N * H * W * Cout * itemsize)
    cost = pl.CostEstimate(flops=flops, transcendentals=0,
                           bytes_accessed=bytes_accessed)

    out_nhwc = pl.pallas_call(
        conv3x3_kernel,
        out_shape=jax.ShapeDtypeStruct((N, H, W, Cout), x_nchw.dtype),
        grid=grid,
        in_specs=[x_spec, halo0_spec, halo1_spec, w_spec, b_spec],
        out_specs=out_spec,
        scratch_shapes=[
            pltpu.VMEM((TH + 2, Wp, Cin), x_nchw.dtype),   # halo slab
            pltpu.VMEM((TH, W, Cout), jnp.float32),        # f32 accumulator
        ],
        compiler_params=pltpu.CompilerParams(
            dimension_semantics=("parallel", "parallel"),
            vmem_limit_bytes=48 * 1024 * 1024,
        ),
        cost_estimate=cost,
    )(x_pad, x_pad, x_pad, w_taps, b3)

    return jnp.transpose(out_nhwc, (0, 3, 1, 2))


def conv_block_forward(x_nchw, weight, bias, drop_prob=0.0):
    """ConvBlock.forward: Conv2d(k=3, pad=1) + Dropout2d(drop_prob).

    x_nchw : (N, Cin, H, W)  -- PyTorch NCHW convention
    weight : (Cout, Cin, 3, 3)
    bias   : (Cout,)
    """
    # Dropout2d with p == 0.0 is the identity (module default / eval mode).
    # TODO(synk): training-mode Dropout2d (channel-wise mask) not implemented.
    del drop_prob
    return _conv3x3_bias(x_nchw, weight, bias)


def init_conv_params(key, in_channels, out_channels):
    """Deterministic init matching nn.Conv2d's default (kaiming-uniform style)."""
    kw, kb = jax.random.split(key)
    fan_in = in_channels * 3 * 3
    bound = 1.0 / jnp.sqrt(fan_in)
    weight = jax.random.uniform(
        kw, (out_channels, in_channels, 3, 3), jnp.float32, -bound, bound)
    bias = jax.random.uniform(
        kb, (out_channels,), jnp.float32, -bound, bound)
    return weight, bias


def _reference_conv(x_nchw, weight, bias):
    out = lax.conv_general_dilated(
        x_nchw, weight, window_strides=(1, 1), padding=((1, 1), (1, 1)),
        dimension_numbers=("NCHW", "OIHW", "NCHW"))
    return out + bias[None, :, None, None]


if __name__ == "__main__":
    key = jax.random.PRNGKey(0)
    kx_, kp = jax.random.split(key)

    N, Cin, H, W = 2, 4, 16, 16
    Cout = 8

    x = jax.random.normal(kx_, (N, Cin, H, W), jnp.float32)
    weight, bias = init_conv_params(kp, Cin, Cout)

    out = conv_block_forward(x, weight, bias, drop_prob=0.0)
    out = jax.block_until_ready(out)

    ref = _reference_conv(x, weight, bias)
    assert out.shape == (N, Cout, H, W)
    assert jnp.allclose(out, ref, atol=1e-5, rtol=1e-5), \
        float(jnp.max(jnp.abs(out - ref)))

    print("KERNEL_OK")
</pallas_src>

<mosaic_0001>
module attributes {stable_mosaic.version = 11 : i64} {
  func.func @conv3x3_kernel(%arg0: i32, %arg1: i32, %arg2: memref<1x8x18x4xf32, #tpu.memory_space<vmem>>, %arg3: memref<1x1x18x4xf32, #tpu.memory_space<vmem>>, %arg4: memref<1x1x18x4xf32, #tpu.memory_space<vmem>>, %arg5: memref<9x4x8xf32, #tpu.memory_space<vmem>>, %arg6: memref<1x1x8xf32, #tpu.memory_space<vmem>>, %arg7: memref<1x8x16x8xf32, #tpu.memory_space<vmem>>, %arg8: memref<10x18x4xf32, #tpu.memory_space<vmem>>, %arg9: memref<8x16x8xf32, #tpu.memory_space<vmem>>) attributes {dimension_semantics = [#tpu.dimension_semantics<parallel>, #tpu.dimension_semantics<parallel>], iteration_bounds = array<i64: 2, 2>, scalar_prefetch = 0 : i64, scratch_operands = 2 : i64, tpu.core_type = #tpu.core_type<tc>, window_params = [{transform_indices = @transform_0, window_bounds = array<i64: 1, 8, 18, 4>}, {transform_indices = @transform_1, window_bounds = array<i64: 1, 1, 18, 4>}, {transform_indices = @transform_2, window_bounds = array<i64: 1, 1, 18, 4>}, {pipeline_mode = #tpu.pipeline_mode<synchronous>, transform_indices = @transform_3, window_bounds = array<i64: 9, 4, 8>}, {pipeline_mode = #tpu.pipeline_mode<synchronous>, transform_indices = @transform_4, window_bounds = array<i64: 1, 1, 8>}, {transform_indices = @transform_5, window_bounds = array<i64: 1, 8, 16, 8>}]} {
    %c0 = arith.constant 0 : index
    %c0_0 = arith.constant 0 : index
    %c0_1 = arith.constant 0 : index
    %c0_2 = arith.constant 0 : index
    %0 = vector.load %arg2[%c0, %c0_0, %c0_1, %c0_2] : memref<1x8x18x4xf32, #tpu.memory_space<vmem>>, vector<1x8x18x4xf32>
    %1 = vector.shape_cast %0 : vector<1x8x18x4xf32> to vector<8x18x4xf32>
    %c0_3 = arith.constant 0 : index
    %c0_4 = arith.constant 0 : index
    %c0_5 = arith.constant 0 : index
    %2 = vector.load %arg8[%c0_3, %c0_4, %c0_5] : memref<10x18x4xf32, #tpu.memory_space<vmem>>, vector<8x18x4xf32>
    tpu.vector_store %arg8[%c0_3, %c0_4, %c0_5], %1 {strides = array<i32>} : memref<10x18x4xf32, #tpu.memory_space<vmem>>, vector<8x18x4xf32>,
    %c0_6 = arith.constant 0 : index
    %c0_7 = arith.constant 0 : index
    %c0_8 = arith.constant 0 : index
    %c0_9 = arith.constant 0 : index
    %3 = vector.load %arg3[%c0_6, %c0_7, %c0_8, %c0_9] : memref<1x1x18x4xf32, #tpu.memory_space<vmem>>, vector<1x1x18x4xf32>
    %4 = vector.shape_cast %3 : vector<1x1x18x4xf32> to vector<1x18x4xf32>
    %c8 = arith.constant 8 : index
    %c0_10 = arith.constant 0 : index
    %c0_11 = arith.constant 0 : index
    %5 = vector.load %arg8[%c8, %c0_10, %c0_11] : memref<10x18x4xf32, #tpu.memory_space<vmem>>, vector<1x18x4xf32>
    tpu.vector_store %arg8[%c8, %c0_10, %c0_11], %4 {strides = array<i32>} : memref<10x18x4xf32, #tpu.memory_space<vmem>>, vector<1x18x4xf32>,
    %c0_12 = arith.constant 0 : index
    %c0_13 = arith.constant 0 : index
    %c0_14 = arith.constant 0 : index
    %c0_15 = arith.constant 0 : index
    %6 = vector.load %arg4[%c0_12, %c0_13, %c0_14, %c0_15] : memref<1x1x18x4xf32, #tpu.memory_space<vmem>>, vector<1x1x18x4xf32>
    %7 = vector.shape_cast %6 : vector<1x1x18x4xf32> to vector<1x18x4xf32>
    %c9 = arith.constant 9 : index
    %c0_16 = arith.constant 0 : index
    %c0_17 = arith.constant 0 : index
    %8 = vector.load %arg8[%c9, %c0_16, %c0_17] : memref<10x18x4xf32, #tpu.memory_space<vmem>>, vector<1x18x4xf32>
    tpu.vector_store %arg8[%c9, %c0_16, %c0_17], %7 {strides = array<i32>} : memref<10x18x4xf32, #tpu.memory_space<vmem>>, vector<1x18x4xf32>,
    %cst = arith.constant 0.000000e+00 : f32
    %9 = vector.broadcast %cst : f32 to vector<8x16x8xf32>
    %c0_18 = arith.constant 0 : index
    %c0_19 = arith.constant 0 : index
    %c0_20 = arith.constant 0 : index
    %10 = vector.load %arg9[%c0_18, %c0_19, %c0_20] : memref<8x16x8xf32, #tpu.memory_space<vmem>>, vector<8x16x8xf32>
    tpu.vector_store %arg9[%c0_18, %c0_19, %c0_20], %9 {strides = array<i32>} : memref<8x16x8xf32, #tpu.memory_space<vmem>>, vector<8x16x8xf32>,
    %c0_21 = arith.constant 0 : index
    %c0_22 = arith.constant 0 : index
    %c0_23 = arith.constant 0 : index
    %11 = vector.load %arg8[%c0_21, %c0_22, %c0_23] : memref<10x18x4xf32, #tpu.memory_space<vmem>>, vector<10x18x4xf32>
    %12 = vector.extract_strided_slice %11 {offsets = [0, 0, 0], sizes = [10, 16, 4], strides = [1, 1, 1]} : vector<10x18x4xf32> to vector<10x16x4xf32>
    %c0_24 = arith.constant 0 : index
    %c0_25 = arith.constant 0 : index
    %c0_26 = arith.constant 0 : index
    %13 = vector.load %arg9[%c0_24, %c0_25, %c0_26] : memref<8x16x8xf32, #tpu.memory_space<vmem>>, vector<8x16x8xf32>
    %14 = vector.extract_strided_slice %12 {offsets = [0, 0, 0], sizes = [8, 16, 4], strides = [1, 1, 1]} : vector<10x16x4xf32> to vector<8x16x4xf32>
    %c0_27 = arith.constant 0 : index
    %c0_28 = arith.constant 0 : index
    %c0_29 = arith.constant 0 : index
    %15 = vector.load %arg5[%c0_27, %c0_28, %c0_29] : memref<9x4x8xf32, #tpu.memory_space<vmem>>, vector<1x4x8xf32>
    %16 = vector.shape_cast %15 : vector<1x4x8xf32> to vector<4x8xf32>
    %cst_30 = arith.constant dense<0.000000e+00> : vector<8x16x8xf32>
    %17 = tpu.matmul %14, %16, %cst_30 {dimension_numbers = #tpu.dot_dimension_numbers<[2], [0], [0, 1], [1], [0, 0, 0, 1, 1, 1], [], []>} : vector<8x16x4xf32>, vector<4x8xf32>, vector<8x16x8xf32> -> vector<8x16x8xf32>
    %18 = arith.addf %13, %17 : vector<8x16x8xf32>
    %c0_31 = arith.constant 0 : index
    %c0_32 = arith.constant 0 : index
    %c0_33 = arith.constant 0 : index
    %19 = vector.load %arg9[%c0_31, %c0_32, %c0_33] : memref<8x16x8xf32, #tpu.memory_space<vmem>>, vector<8x16x8xf32>
    tpu.vector_store %arg9[%c0_31, %c0_32, %c0_33], %18 {strides = array<i32>} : memref<8x16x8xf32, #tpu.memory_space<vmem>>, vector<8x16x8xf32>,
    %c0_34 = arith.constant 0 : index
    %c0_35 = arith.constant 0 : index
    %c0_36 = arith.constant 0 : index
    %20 = vector.load %arg9[%c0_34, %c0_35, %c0_36] : memref<8x16x8xf32, #tpu.memory_space<vmem>>, vector<8x16x8xf32>
    %21 = vector.extract_strided_slice %12 {offsets = [1, 0, 0], sizes = [8, 16, 4], strides = [1, 1, 1]} : vector<10x16x4xf32> to vector<8x16x4xf32>
    %c3 = arith.constant 3 : index
    %c0_37 = arith.constant 0 : index
    %c0_38 = arith.constant 0 : index
    %22 = vector.load %arg5[%c3, %c0_37, %c0_38] : memref<9x4x8xf32, #tpu.memory_space<vmem>>, vector<1x4x8xf32>
    %23 = vector.shape_cast %22 : vector<1x4x8xf32> to vector<4x8xf32>
    %cst_39 = arith.constant dense<0.000000e+00> : vector<8x16x8xf32>
    %24 = tpu.matmul %21, %23, %cst_39 {dimension_numbers = #tpu.dot_dimension_numbers<[2], [0], [0, 1], [1], [0, 0, 0, 1, 1, 1], [], []>} : vector<8x16x4xf32>, vector<4x8xf32>, vector<8x16x8xf32> -> vector<8x16x8xf32>
    %25 = arith.addf %20, %24 : vector<8x16x8xf32>
    %c0_40 = arith.constant 0 : index
    %c0_41 = arith.constant 0 : index
    %c0_42 = arith.constant 0 : index
    %26 = vector.load %arg9[%c0_40, %c0_41, %c0_42] : memref<8x16x8xf32, #tpu.memory_space<vmem>>, vector<8x16x8xf32>
    tpu.vector_store %arg9[%c0_40, %c0_41, %c0_42], %25 {strides = array<i32>} : memref<8x16x8xf32, #tpu.memory_space<vmem>>, vector<8x16x8xf32>,
    %c0_43 = arith.constant 0 : index
    %c0_44 = arith.constant 0 : index
    %c0_45 = arith.constant 0 : index
    %27 = vector.load %arg9[%c0_43, %c0_44, %c0_45] : memref<8x16x8xf32, #tpu.memory_space<vmem>>, vector<8x16x8xf32>
    %28 = vector.extract_strided_slice %12 {offsets = [2, 0, 0], sizes = [8, 16, 4], strides = [1, 1, 1]} : vector<10x16x4xf32> to vector<8x16x4xf32>
    %c6 = arith.constant 6 : index
    %c0_46 = arith.constant 0 : index
    %c0_47 = arith.constant 0 : index
    %29 = vector.load %arg5[%c6, %c0_46, %c0_47] : memref<9x4x8xf32, #tpu.memory_space<vmem>>, vector<1x4x8xf32>
    %30 = vector.shape_cast %29 : vector<1x4x8xf32> to vector<4x8xf32>
    %cst_48 = arith.constant dense<0.000000e+00> : vector<8x16x8xf32>
    %31 = tpu.matmul %28, %30, %cst_48 {dimension_numbers = #tpu.dot_dimension_numbers<[2], [0], [0, 1], [1], [0, 0, 0, 1, 1, 1], [], []>} : vector<8x16x4xf32>, vector<4x8xf32>, vector<8x16x8xf32> -> vector<8x16x8xf32>
    %32 = arith.addf %27, %31 : vector<8x16x8xf32>
    %c0_49 = arith.constant 0 : index
    %c0_50 = arith.constant 0 : index
    %c0_51 = arith.constant 0 : index
    %33 = vector.load %arg9[%c0_49, %c0_50, %c0_51] : memref<8x16x8xf32, #tpu.memory_space<vmem>>, vector<8x16x8xf32>
    tpu.vector_store %arg9[%c0_49, %c0_50, %c0_51], %32 {strides = array<i32>} : memref<8x16x8xf32, #tpu.memory_space<vmem>>, vector<8x16x8xf32>,
    %34 = vector.extract_strided_slice %11 {offsets = [0, 1, 0], sizes = [10, 16, 4], strides = [1, 1, 1]} : vector<10x18x4xf32> to vector<10x16x4xf32>
    %c0_52 = arith.constant 0 : index
    %c0_53 = arith.constant 0 : index
    %c0_54 = arith.constant 0 : index
    %35 = vector.load %arg9[%c0_52, %c0_53, %c0_54] : memref<8x16x8xf32, #tpu.memory_space<vmem>>, vector<8x16x8xf32>
    %36 = vector.extract_strided_slice %34 {offsets = [0, 0, 0], sizes = [8, 16, 4], strides = [1, 1, 1]} : vector<10x16x4xf32> to vector<8x16x4xf32>
    %c1 = arith.constant 1 : index
    %c0_55 = arith.constant 0 : index
    %c0_56 = arith.constant 0 : index
    %37 = vector.load %arg5[%c1, %c0_55, %c0_56] : memref<9x4x8xf32, #tpu.memory_space<vmem>>, vector<1x4x8xf32>
    %38 = vector.shape_cast %37 : vector<1x4x8xf32> to vector<4x8xf32>
    %cst_57 = arith.constant dense<0.000000e+00> : vector<8x16x8xf32>
    %39 = tpu.matmul %36, %38, %cst_57 {dimension_numbers = #tpu.dot_dimension_numbers<[2], [0], [0, 1], [1], [0, 0, 0, 1, 1, 1], [], []>} : vector<8x16x4xf32>, vector<4x8xf32>, vector<8x16x8xf32> -> vector<8x16x8xf32>
    %40 = arith.addf %35, %39 : vector<8x16x8xf32>
    %c0_58 = arith.constant 0 : index
    %c0_59 = arith.constant 0 : index
    %c0_60 = arith.constant 0 : index
    %41 = vector.load %arg9[%c0_58, %c0_59, %c0_60] : memref<8x16x8xf32, #tpu.memory_space<vmem>>, vector<8x16x8xf32>
    tpu.vector_store %arg9[%c0_58, %c0_59, %c0_60], %40 {strides = array<i32>} : memref<8x16x8xf32, #tpu.memory_space<vmem>>, vector<8x16x8xf32>,
    %c0_61 = arith.constant 0 : index
    %c0_62 = arith.constant 0 : index
    %c0_63 = arith.constant 0 : index
    %42 = vector.load %arg9[%c0_61, %c0_62, %c0_63] : memref<8x16x8xf32, #tpu.memory_space<vmem>>, vector<8x16x8xf32>
    %43 = vector.extract_strided_slice %34 {offsets = [1, 0, 0], sizes = [8, 16, 4], strides = [1, 1, 1]} : vector<10x16x4xf32> to vector<8x16x4xf32>
    %c4 = arith.constant 4 : index
    %c0_64 = arith.constant 0 : index
    %c0_65 = arith.constant 0 : index
    %44 = vector.load %arg5[%c4, %c0_64, %c0_65] : memref<9x4x8xf32, #tpu.memory_space<vmem>>, vector<1x4x8xf32>
    %45 = vector.shape_cast %44 : vector<1x4x8xf32> to vector<4x8xf32>
    %cst_66 = arith.constant dense<0.000000e+00> : vector<8x16x8xf32>
    %46 = tpu.matmul %43, %45, %cst_66 {dimension_numbers = #tpu.dot_dimension_numbers<[2], [0], [0, 1], [1], [0, 0, 0, 1, 1, 1], [], []>} : vector<8x16x4xf32>, vector<4x8xf32>, vector<8x16x8xf32> -> vector<8x16x8xf32>
    %47 = arith.addf %42, %46 : vector<8x16x8xf32>
    %c0_67 = arith.constant 0 : index
    %c0_68 = arith.constant 0 : index
    %c0_69 = arith.constant 0 : index
    %48 = vector.load %arg9[%c0_67, %c0_68, %c0_69] : memref<8x16x8xf32, #tpu.memory_space<vmem>>, vector<8x16x8xf32>
    tpu.vector_store %arg9[%c0_67, %c0_68, %c0_69], %47 {strides = array<i32>} : memref<8x16x8xf32, #tpu.memory_space<vmem>>, vector<8x16x8xf32>,
    %c0_70 = arith.constant 0 : index
    %c0_71 = arith.constant 0 : index
    %c0_72 = arith.constant 0 : index
    %49 = vector.load %arg9[%c0_70, %c0_71, %c0_72] : memref<8x16x8xf32, #tpu.memory_space<vmem>>, vector<8x16x8xf32>
    %50 = vector.extract_strided_slice %34 {offsets = [2, 0, 0], sizes = [8, 16, 4], strides = [1, 1, 1]} : vector<10x16x4xf32> to vector<8x16x4xf32>
    %c7 = arith.constant 7 : index
    %c0_73 = arith.constant 0 : index
    %c0_74 = arith.constant 0 : index
    %51 = vector.load %arg5[%c7, %c0_73, %c0_74] : memref<9x4x8xf32, #tpu.memory_space<vmem>>, vector<1x4x8xf32>
    %52 = vector.shape_cast %51 : vector<1x4x8xf32> to vector<4x8xf32>
    %cst_75 = arith.constant dense<0.000000e+00> : vector<8x16x8xf32>
    %53 = tpu.matmul %50, %52, %cst_75 {dimension_numbers = #tpu.dot_dimension_numbers<[2], [0], [0, 1], [1], [0, 0, 0, 1, 1, 1], [], []>} : vector<8x16x4xf32>, vector<4x8xf32>, vector<8x16x8xf32> -> vector<8x16x8xf32>
    %54 = arith.addf %49, %53 : vector<8x16x8xf32>
    %c0_76 = arith.constant 0 : index
    %c0_77 = arith.constant 0 : index
    %c0_78 = arith.constant 0 : index
    %55 = vector.load %arg9[%c0_76, %c0_77, %c0_78] : memref<8x16x8xf32, #tpu.memory_space<vmem>>, vector<8x16x8xf32>
    tpu.vector_store %arg9[%c0_76, %c0_77, %c0_78], %54 {strides = array<i32>} : memref<8x16x8xf32, #tpu.memory_space<vmem>>, vector<8x16x8xf32>,
    %56 = vector.extract_strided_slice %11 {offsets = [0, 2, 0], sizes = [10, 16, 4], strides = [1, 1, 1]} : vector<10x18x4xf32> to vector<10x16x4xf32>
    %c0_79 = arith.constant 0 : index
    %c0_80 = arith.constant 0 : index
    %c0_81 = arith.constant 0 : index
    %57 = vector.load %arg9[%c0_79, %c0_80, %c0_81] : memref<8x16x8xf32, #tpu.memory_space<vmem>>, vector<8x16x8xf32>
    %58 = vector.extract_strided_slice %56 {offsets = [0, 0, 0], sizes = [8, 16, 4], strides = [1, 1, 1]} : vector<10x16x4xf32> to vector<8x16x4xf32>
    %c2 = arith.constant 2 : index
    %c0_82 = arith.constant 0 : index
    %c0_83 = arith.constant 0 : index
    %59 = vector.load %arg5[%c2, %c0_82, %c0_83] : memref<9x4x8xf32, #tpu.memory_space<vmem>>, vector<1x4x8xf32>
    %60 = vector.shape_cast %59 : vector<1x4x8xf32> to vector<4x8xf32>
    %cst_84 = arith.constant dense<0.000000e+00> : vector<8x16x8xf32>
    %61 = tpu.matmul %58, %60, %cst_84 {dimension_numbers = #tpu.dot_dimension_numbers<[2], [0], [0, 1], [1], [0, 0, 0, 1, 1, 1], [], []>} : vector<8x16x4xf32>, vector<4x8xf32>, vector<8x16x8xf32> -> vector<8x16x8xf32>
    %62 = arith.addf %57, %61 : vector<8x16x8xf32>
    %c0_85 = arith.constant 0 : index
    %c0_86 = arith.constant 0 : index
    %c0_87 = arith.constant 0 : index
    %63 = vector.load %arg9[%c0_85, %c0_86, %c0_87] : memref<8x16x8xf32, #tpu.memory_space<vmem>>, vector<8x16x8xf32>
    tpu.vector_store %arg9[%c0_85, %c0_86, %c0_87], %62 {strides = array<i32>} : memref<8x16x8xf32, #tpu.memory_space<vmem>>, vector<8x16x8xf32>,
    %c0_88 = arith.constant 0 : index
    %c0_89 = arith.constant 0 : index
    %c0_90 = arith.constant 0 : index
    %64 = vector.load %arg9[%c0_88, %c0_89, %c0_90] : memref<8x16x8xf32, #tpu.memory_space<vmem>>, vector<8x16x8xf32>
    %65 = vector.extract_strided_slice %56 {offsets = [1, 0, 0], sizes = [8, 16, 4], strides = [1, 1, 1]} : vector<10x16x4xf32> to vector<8x16x4xf32>
    %c5 = arith.constant 5 : index
    %c0_91 = arith.constant 0 : index
    %c0_92 = arith.constant 0 : index
    %66 = vector.load %arg5[%c5, %c0_91, %c0_92] : memref<9x4x8xf32, #tpu.memory_space<vmem>>, vector<1x4x8xf32>
    %67 = vector.shape_cast %66 : vector<1x4x8xf32> to vector<4x8xf32>
    %cst_93 = arith.constant dense<0.000000e+00> : vector<8x16x8xf32>
    %68 = tpu.matmul %65, %67, %cst_93 {dimension_numbers = #tpu.dot_dimension_numbers<[2], [0], [0, 1], [1], [0, 0, 0, 1, 1, 1], [], []>} : vector<8x16x4xf32>, vector<4x8xf32>, vector<8x16x8xf32> -> vector<8x16x8xf32>
    %69 = arith.addf %64, %68 : vector<8x16x8xf32>
    %c0_94 = arith.constant 0 : index
    %c0_95 = arith.constant 0 : index
    %c0_96 = arith.constant 0 : index
    %70 = vector.load %arg9[%c0_94, %c0_95, %c0_96] : memref<8x16x8xf32, #tpu.memory_space<vmem>>, vector<8x16x8xf32>
    tpu.vector_store %arg9[%c0_94, %c0_95, %c0_96], %69 {strides = array<i32>} : memref<8x16x8xf32, #tpu.memory_space<vmem>>, vector<8x16x8xf32>,
    %c0_97 = arith.constant 0 : index
    %c0_98 = arith.constant 0 : index
    %c0_99 = arith.constant 0 : index
    %71 = vector.load %arg9[%c0_97, %c0_98, %c0_99] : memref<8x16x8xf32, #tpu.memory_space<vmem>>, vector<8x16x8xf32>
    %72 = vector.extract_strided_slice %56 {offsets = [2, 0, 0], sizes = [8, 16, 4], strides = [1, 1, 1]} : vector<10x16x4xf32> to vector<8x16x4xf32>
    %c8_100 = arith.constant 8 : index
    %c0_101 = arith.constant 0 : index
    %c0_102 = arith.constant 0 : index
    %73 = vector.load %arg5[%c8_100, %c0_101, %c0_102] : memref<9x4x8xf32, #tpu.memory_space<vmem>>, vector<1x4x8xf32>
    %74 = vector.shape_cast %73 : vector<1x4x8xf32> to vector<4x8xf32>
    %cst_103 = arith.constant dense<0.000000e+00> : vector<8x16x8xf32>
    %75 = tpu.matmul %72, %74, %cst_103 {dimension_numbers = #tpu.dot_dimension_numbers<[2], [0], [0, 1], [1], [0, 0, 0, 1, 1, 1], [], []>} : vector<8x16x4xf32>, vector<4x8xf32>, vector<8x16x8xf32> -> vector<8x16x8xf32>
    %76 = arith.addf %71, %75 : vector<8x16x8xf32>
    %c0_104 = arith.constant 0 : index
    %c0_105 = arith.constant 0 : index
    %c0_106 = arith.constant 0 : index
    %77 = vector.load %arg9[%c0_104, %c0_105, %c0_106] : memref<8x16x8xf32, #tpu.memory_space<vmem>>, vector<8x16x8xf32>
    tpu.vector_store %arg9[%c0_104, %c0_105, %c0_106], %76 {strides = array<i32>} : memref<8x16x8xf32, #tpu.memory_space<vmem>>, vector<8x16x8xf32>,
    %c0_107 = arith.constant 0 : index
    %c0_108 = arith.constant 0 : index
    %c0_109 = arith.constant 0 : index
    %78 = vector.load %arg9[%c0_107, %c0_108, %c0_109] : memref<8x16x8xf32, #tpu.memory_space<vmem>>, vector<8x16x8xf32>
    %c0_110 = arith.constant 0 : index
    %c0_111 = arith.constant 0 : index
    %c0_112 = arith.constant 0 : index
    %79 = vector.load %arg6[%c0_110, %c0_111, %c0_112] : memref<1x1x8xf32, #tpu.memory_space<vmem>>, vector<1x1x8xf32>
    %80 = vector.broadcast %79 : vector<1x1x8xf32> to vector<8x16x8xf32>
    %81 = arith.addf %78, %80 : vector<8x16x8xf32>
    %c0_113 = arith.constant 0 : index
    %c0_114 = arith.constant 0 : index
    %c0_115 = arith.constant 0 : index
    %c0_116 = arith.constant 0 : index
    %82 = vector.load %arg7[%c0_113, %c0_114, %c0_115, %c0_116] : memref<1x8x16x8xf32, #tpu.memory_space<vmem>>, vector<1x8x16x8xf32>
    %83 = vector.shape_cast %82 : vector<1x8x16x8xf32> to vector<8x16x8xf32>
    %84 = vector.shape_cast %81 : vector<8x16x8xf32> to vector<1x8x16x8xf32>
    tpu.vector_store %arg7[%c0_113, %c0_114, %c0_115, %c0_116], %84 {strides = array<i32>} : memref<1x8x16x8xf32, #tpu.memory_space<vmem>>, vector<1x8x16x8xf32>,
    return
  }
  func.func @transform_0(%arg0: i32, %arg1: i32) -> (i32, i32, i32, i32) {
    %c0_i32 = arith.constant 0 : i32
    %c0_i32_0 = arith.constant 0 : i32
    %c0_i32_1 = arith.constant 0 : i32
    return %arg0, %arg1, %c0_i32, %c0_i32_0 : i32, i32, i32, i32
  }
  func.func @transform_1(%arg0: i32, %arg1: i32) -> (i32, i32, i32, i32) {
    %c8_i32 = arith.constant 8 : i32
    %0 = arith.muli %arg1, %c8_i32 : i32
    %c8_i32_0 = arith.constant 8 : i32
    %1 = arith.addi %0, %c8_i32_0 : i32
    %c0_i32 = arith.constant 0 : i32
    %c0_i32_1 = arith.constant 0 : i32
    %c0_i32_2 = arith.constant 0 : i32
    return %arg0, %1, %c0_i32, %c0_i32_1 : i32, i32, i32, i32
  }
  func.func @transform_2(%arg0: i32, %arg1: i32) -> (i32, i32, i32, i32) {
    %c8_i32 = arith.constant 8 : i32
    %0 = arith.muli %arg1, %c8_i32 : i32
    %c8_i32_0 = arith.constant 8 : i32
    %1 = arith.addi %0, %c8_i32_0 : i32
    %c1_i32 = arith.constant 1 : i32
    %2 = arith.addi %1, %c1_i32 : i32
    %c0_i32 = arith.constant 0 : i32
    %c0_i32_1 = arith.constant 0 : i32
    %c0_i32_2 = arith.constant 0 : i32
    return %arg0, %2, %c0_i32, %c0_i32_1 : i32, i32, i32, i32
  }
  func.func @transform_3(%arg0: i32, %arg1: i32) -> (i32, i32, i32) {
    %c0_i32 = arith.constant 0 : i32
    %c0_i32_0 = arith.constant 0 : i32
    %c0_i32_1 = arith.constant 0 : i32
    %c0_i32_2 = arith.constant 0 : i32
    return %c0_i32, %c0_i32_0, %c0_i32_1 : i32, i32, i32
  }
  func.func @transform_4(%arg0: i32, %arg1: i32) -> (i32, i32, i32) {
    %c0_i32 = arith.constant 0 : i32
    %c0_i32_0 = arith.constant 0 : i32
    %c0_i32_1 = arith.constant 0 : i32
    %c0_i32_2 = arith.constant 0 : i32
    return %c0_i32, %c0_i32_0, %c0_i32_1 : i32, i32, i32
  }
  func.func @transform_5(%arg0: i32, %arg1: i32) -> (i32, i32, i32, i32) {
    %c0_i32 = arith.constant 0 : i32
    %c0_i32_0 = arith.constant 0 : i32
    %c0_i32_1 = arith.constant 0 : i32
    return %arg0, %arg1, %c0_i32, %c0_i32_0 : i32, i32, i32, i32
  }
}

</mosaic_0001>

<llo_original>
// kernel: _conv3x3_bias.1
$region0: #{_conv3x3_bias.1}
  #allocation0 [shape = 'u32[]', space=smem, size = 0x4, offset = 0x4, fixed_abs, tag = 'smem constant byte address 0x4 - core index']
  #allocation1 [shape = 'u32[144,128]{1,0:T(1,128)}', space=vmem, size = 0x12000, scoped, tag = 'internal scratch']
  #allocation2 [shape = 'f32[10,18,4]{2,1,0:T(8,128)}', space=vmem, size = 0x1e000, scoped, tag = 'scratch operand']
  #allocation3 [shape = 'f32[8,16,8]{2,1,0:T(8,128)}', space=vmem, size = 0x10000, scoped, tag = 'scratch operand']
  %s0 = inlined_call_operand.vmem [shape: f32[2,18,18,4], index: 0, kind: input, shape index: {}, may-alias: {0,1,2}]
  %s1 = inlined_call_operand.vmem [shape: f32[2,18,18,4], index: 1, kind: input, shape index: {}, may-alias: {0,1,2}]
  %s2 = inlined_call_operand.vmem [shape: f32[2,18,18,4], index: 2, kind: input, shape index: {}, may-alias: {0,1,2}]
  %s3 = inlined_call_operand.vmem [shape: f32[9,4,8], index: 3, kind: input, shape index: {}]
  %s4 = inlined_call_operand.vmem [shape: f32[1,1,8], index: 4, kind: input, shape index: {}]
  %s5 = inlined_call_operand.vmem [shape: f32[2,16,16,8], index: 5, kind: output, shape index: {}]
  %s6 = sld [smem:[#allocation0]]
  $region53: #{_conv3x3_bias.1} parent=0
    _
  %s8 = ssub.s32 1, %s6
  %s9 = scalar_select 0, %s8, %s6
  loop: start=0, step=1, limit=6
  $region2: #{_conv3x3_bias.1} parent=0 // loop_pre_header
    _
  $region3: #{_conv3x3_bias.1} parent=0 // loop_header
    %s11 = sphi 0, %s15
    %p12 = scmp.ge.s32.totalorder %s11, 6
    %s18 = sphi 0, %s30
    %s19 = sphi 0, %s26
    %s20 = sphi 0, %s18
    %s21 = sphi 0, %s19
    %s22 = sphi 0, %s20
    %s23 = sphi 0, %s21
    %s35 = sphi 0, %s37
    %s38 = sphi 0, %s35
    %s39 = sphi 0, %s38
    %s55 = sphi 0, %s39
    %s67 = sphi 0, %s69
    %s70 = sphi 0, %s67
    %s71 = sphi 0, %s70
    %s87 = sphi 0, %s71
    %s99 = sphi 0, %s101
    %s102 = sphi 0, %s99
    %s103 = sphi 0, %s102
    %s119 = sphi 0, %s103
    %s123 = sphi 0, %s123
    %s125 = sphi 0, %s123
    %s126 = sphi 0, %s125
    %s140 = sphi 0, %s126
    %s144 = sphi 0, %s144
    %s146 = sphi 0, %s144
    %s147 = sphi 0, %s146
    %s161 = sphi 0, %s147
    %s169 = sphi 0, %s171
    %s172 = sphi 0, %s169
    %s173 = sphi 0, %s172
    %s189 = sphi 0, %s173
  $region4: #{_conv3x3_bias.1} parent=0 // loop_header_branch
    %14 = sbr.rel (%p12) target = $region8
  $region5: #{_conv3x3_bias.1} parent=0 // loop_body
    %s16 = ssub.s32 %s11, 1
    %s17 = ssub.s32 %s11, 2
    %s24 = sadd.s32 1, %s19
    %p25 = scmp.ge.s32.totalorder %s24, 2
    %s26 = scalar_select %p25, 0, %s24
    %s27 = sadd.s32 1, %s18
    %s28 = scalar_select %p25, %s27, %s18
    %p29 = scmp.ge.s32.totalorder %s28, 2
    %s30 = scalar_select %p29, 0, %s28
    %s31 = ssub.s32 %s18, %s30
    %s32 = ssub.s32 %s19, %s26
    %s33 = sor.u32 %s31, %s32
    %p34 = scmp.eq.s32.totalorder %s33, 0
    %s36 = sadd.s32 %s35, 1
    %s37 = scalar_select %p34, %s35, %s36
    %p40 = pneg %p34
    %p41 = scmp.eq.s32.totalorder %s11, 3
    %p42 = por %p40, %p41
    %p43 = scmp.ne.s32.totalorder %s35, %s38
    %p44 = scmp.eq.s32.totalorder %s11, 0
    %p45 = por %p43, %p44
    %p46 = scmp.ne.s32.totalorder %s35, %s38
    %p47 = scmp.eq.s32.totalorder %s16, 3
    %p48 = por %p46, %p47
    %p49 = scmp.ne.s32.totalorder %s38, %s39
    %p50 = scmp.eq.s32.totalorder %s16, 0
    %p51 = por %p49, %p50
    %p52 = scmp.ne.s32.totalorder %s38, %s39
    %p53 = scmp.eq.s32.totalorder %s17, 3
    %p54 = por %p52, %p53
    %p56 = scmp.ne.s32.totalorder %s39, %s55
    %p57 = scmp.eq.s32.totalorder %s17, 0
    %p58 = por %p56, %p57
    %s59 = smul.u32 %s19, 8
    %s60 = sadd.s32 %s59, 8
    %s61 = smul.u32 %s26, 8
    %s62 = sadd.s32 %s61, 8
    %s63 = ssub.s32 %s18, %s30
    %s64 = ssub.s32 %s60, %s62
    %s65 = sor.u32 %s63, %s64
    %p66 = scmp.eq.s32.totalorder %s65, 0
    %s68 = sadd.s32 %s67, 1
    %s69 = scalar_select %p66, %s67, %s68
    %p72 = pneg %p66
    %p73 = scmp.eq.s32.totalorder %s11, 3
    %p74 = por %p72, %p73
    %p75 = scmp.ne.s32.totalorder %s67, %s70
    %p76 = scmp.eq.s32.totalorder %s11, 0
    %p77 = por %p75, %p76
    %p78 = scmp.ne.s32.totalorder %s67, %s70
    %p79 = scmp.eq.s32.totalorder %s16, 3
    %p80 = por %p78, %p79
    %p81 = scmp.ne.s32.totalorder %s70, %s71
    %p82 = scmp.eq.s32.totalorder %s16, 0
    %p83 = por %p81, %p82
    %p84 = scmp.ne.s32.totalorder %s70, %s71
    %p85 = scmp.eq.s32.totalorder %s17, 3
    %p86 = por %p84, %p85
    %p88 = scmp.ne.s32.totalorder %s71, %s87
    %p89 = scmp.eq.s32.totalorder %s17, 0
    %p90 = por %p88, %p89
    %s91 = smul.u32 %s19, 8
    %s92 = sadd.s32 %s91, 9
    %s93 = smul.u32 %s26, 8
    %s94 = sadd.s32 %s93, 9
    %s95 = ssub.s32 %s18, %s30
    %s96 = ssub.s32 %s92, %s94
    %s97 = sor.u32 %s95, %s96
    %p98 = scmp.eq.s32.totalorder %s97, 0
    %s100 = sadd.s32 %s99, 1
    %s101 = scalar_select %p98, %s99, %s100
    %p104 = pneg %p98
    %p105 = scmp.eq.s32.totalorder %s11, 3
    %p106 = por %p104, %p105
    %p107 = scmp.ne.s32.totalorder %s99, %s102
    %p108 = scmp.eq.s32.totalorder %s11, 0
    %p109 = por %p107, %p108
    %p110 = scmp.ne.s32.totalorder %s99, %s102
    %p111 = scmp.eq.s32.totalorder %s16, 3
    %p112 = por %p110, %p111
    %p113 = scmp.ne.s32.totalorder %s102, %s103
    %p114 = scmp.eq.s32.totalorder %s16, 0
    %p115 = por %p113, %p114
    %p116 = scmp.ne.s32.totalorder %s102, %s103
    %p117 = scmp.eq.s32.totalorder %s17, 3
    %p118 = por %p116, %p117
    %p120 = scmp.ne.s32.totalorder %s103, %s119
    %p121 = scmp.eq.s32.totalorder %s17, 0
    %p122 = por %p120, %p121
    %s124 = sadd.s32 %s123, 1
    %p127 = scmp.eq.s32.totalorder %s11, 3
    %p128 = scmp.ne.s32.totalorder %s123, %s125
    %p129 = scmp.eq.s32.totalorder %s11, 0
    %p130 = por %p128, %p129
    %p131 = scmp.ne.s32.totalorder %s123, %s125
    %p132 = scmp.eq.s32.totalorder %s16, 3
    %p133 = por %p131, %p132
    %p134 = scmp.ne.s32.totalorder %s125, %s126
    %p135 = scmp.eq.s32.totalorder %s16, 0
    %p136 = por %p134, %p135
    %p137 = scmp.ne.s32.totalorder %s125, %s126
    %p138 = scmp.eq.s32.totalorder %s17, 3
    %p139 = por %p137, %p138
    %p141 = scmp.ne.s32.totalorder %s126, %s140
    %p142 = scmp.eq.s32.totalorder %s17, 0
    %p143 = por %p141, %p142
    %s145 = sadd.s32 %s144, 1
    %p148 = scmp.eq.s32.totalorder %s11, 3
    %p149 = scmp.ne.s32.totalorder %s144, %s146
    %p150 = scmp.eq.s32.totalorder %s11, 0
    %p151 = por %p149, %p150
    %p152 = scmp.ne.s32.totalorder %s144, %s146
    %p153 = scmp.eq.s32.totalorder %s16, 3
    %p154 = por %p152, %p153
    %p155 = scmp.ne.s32.totalorder %s146, %s147
    %p156 = scmp.eq.s32.totalorder %s16, 0
    %p157 = por %p155, %p156
    %p158 = scmp.ne.s32.totalorder %s146, %s147
    %p159 = scmp.eq.s32.totalorder %s17, 3
    %p160 = por %p158, %p159
    %p162 = scmp.ne.s32.totalorder %s147, %s161
    %p163 = scmp.eq.s32.totalorder %s17, 0
    %p164 = por %p162, %p163
    %s165 = ssub.s32 %s18, %s30
    %s166 = ssub.s32 %s19, %s26
    %s167 = sor.u32 %s165, %s166
    %p168 = scmp.eq.s32.totalorder %s167, 0
    %s170 = sadd.s32 %s169, 1
    %s171 = scalar_select %p168, %s169, %s170
    %p174 = pneg %p168
    %p175 = scmp.eq.s32.totalorder %s11, 3
    %p176 = por %p174, %p175
    %p177 = scmp.ne.s32.totalorder %s169, %s172
    %p178 = scmp.eq.s32.totalorder %s11, 0
    %p179 = por %p177, %p178
    %p180 = scmp.ne.s32.totalorder %s169, %s172
    %p181 = scmp.eq.s32.totalorder %s16, 3
    %p182 = por %p180, %p181
    %p183 = scmp.ne.s32.totalorder %s172, %s173
    %p184 = scmp.eq.s32.totalorder %s16, 0
    %p185 = por %p183, %p184
    %p186 = scmp.ne.s32.totalorder %s172, %s173
    %p187 = scmp.eq.s32.totalorder %s17, 3
    %p188 = por %p186, %p187
    %p190 = scmp.ne.s32.totalorder %s173, %s189
    %p191 = scmp.eq.s32.totalorder %s17, 0
    %p192 = por %p190, %p191
    %p193 = scmp.le.s32.totalorder 1, %s11
    %p194 = scmp.lt.s32.totalorder %s11, 5
    %p195 = pnand %p193, %p194
    %p196 = pneg %p195
    // Predicated region
    $region9: #{_conv3x3_bias.1} parent=5 // pred_check
      _
    $region10: #{_conv3x3_bias.1} parent=5 // pred_check_branch
      %198 = sbr.rel (%p195) target = $region12
    $region11: #{_conv3x3_bias.1} parent=5 // pred_region
      %s199 = ssub.s32 %s11, 1
      // Predicated region
      $region13: #{_conv3x3_bias.1} parent=11 // pred_check
        %p200 = pneg %p136
      $region14: #{_conv3x3_bias.1} parent=11 // pred_check_branch
        %202 = sbr.rel (%p200) target = $region16
      $region15: #{_conv3x3_bias.1} parent=11 // pred_region
        _
      $region16: #{_conv3x3_bias.1} parent=11 // pred_fallthru
        _
      // Predicated region
      $region17: #{_conv3x3_bias.1} parent=11 // pred_check
        %p203 = pneg %p157
      $region18: #{_conv3x3_bias.1} parent=11 // pred_check_branch
        %205 = sbr.rel (%p203) target = $region20
      $region19: #{_conv3x3_bias.1} parent=11 // pred_region
        _
      $region20: #{_conv3x3_bias.1} parent=11 // pred_fallthru
        _
    $region12: #{_conv3x3_bias.1} parent=5 // pred_fallthru
      _
    %p206 = scmp.lt.s32.totalorder %s11, 4
    // Predicated region
    $region21: #{_conv3x3_bias.1} parent=5 // pred_check
      %p207 = pneg %p206
    $region22: #{_conv3x3_bias.1} parent=5 // pred_check_branch
      %209 = sbr.rel (%p207) target = $region24
    $region23: #{_conv3x3_bias.1} parent=5 // pred_region
      // Predicated region
      $region25: #{_conv3x3_bias.1} parent=23 // pred_check
        %p210 = pneg %p45
      $region26: #{_conv3x3_bias.1} parent=23 // pred_check_branch
        %212 = sbr.rel (%p210) target = $region28
      $region27: #{_conv3x3_bias.1} parent=23 // pred_region
        %s213 = smul.u32 8, %s19
        %s214 = ssub.s32 18, %s213
        %p215 = scmp.lt.s32.totalorder %s214, 8
        %s216 = scalar_select %p215, %s214, 8
        %s217 = smul.u32 128, %s216
        %s218 = smul.u32 %s217, 3
        %p219 = scmp.lt.s32.totalorder %s18, 1
        %s220 = scalar_select %p219, %s18, 1
        %p221 = scmp.lt.s32.totalorder %s213, 17
        %s222 = scalar_select %p221, %s213, 17
        %s223 = smul.addr %s222, 3
        %s224 = smul.addr %s220, 54
        %s225 = sadd.s32 %s223, %s224
        %s226 = smul.addr %s225, 8
        %s227 = scalar_lea.vmem %s0, %s226
        %s228 = smul.u32 8, %s19
        %s229 = ssub.s32 18, %s228
        %p230 = scmp.lt.s32.totalorder %s229, 8
        %s231 = scalar_select %p230, %s229, 8
        %s232 = smul.u32 128, %s231
        %s233 = smul.u32 %s232, 3
      $region28: #{_conv3x3_bias.1} parent=23 // pred_fallthru
        _
      // Predicated region
      $region29: #{_conv3x3_bias.1} parent=23 // pred_check
        %p234 = pneg %p77
      $region30: #{_conv3x3_bias.1} parent=23 // pred_check_branch
        %236 = sbr.rel (%p234) target = $region32
      $region31: #{_conv3x3_bias.1} parent=23 // pred_region
        %s237 = smul.u32 %s19, 8
        %s238 = sadd.s32 %s237, 8
        %p239 = scmp.lt.s32.totalorder %s18, 1
        %s240 = scalar_select %p239, %s18, 1
        %p241 = scmp.lt.s32.totalorder %s238, 17
        %s242 = scalar_select %p241, %s238, 17
        %s243 = smul.addr %s242, 3
        %s244 = smul.addr %s240, 54
        %s245 = sadd.s32 %s243, %s244
        %s246 = smul.addr %s245, 8
        %s247 = scalar_lea.vmem %s1, %s246
        %s248 = smul.u32 %s19, 8
        %s249 = sadd.s32 %s248, 8
      $region32: #{_conv3x3_bias.1} parent=23 // pred_fallthru
        _
      // Predicated region
      $region33: #{_conv3x3_bias.1} parent=23 // pred_check
        %p250 = pneg %p109
      $region34: #{_conv3x3_bias.1} parent=23 // pred_check_branch
        %252 = sbr.rel (%p250) target = $region36
      $region35: #{_conv3x3_bias.1} parent=23 // pred_region
        %s253 = smul.u32 %s19, 8
        %s254 = sadd.s32 %s253, 9
        %p255 = scmp.lt.s32.totalorder %s18, 1
        %s256 = scalar_select %p255, %s18, 1
        %p257 = scmp.lt.s32.totalorder %s254, 17
        %s258 = scalar_select %p257, %s254, 17
        %s259 = smul.addr %s258, 3
        %s260 = smul.addr %s256, 54
        %s261 = sadd.s32 %s259, %s260
        %s262 = smul.addr %s261, 8
        %s263 = scalar_lea.vmem %s2, %s262
        %s264 = smul.u32 %s19, 8
        %s265 = sadd.s32 %s264, 9
      $region36: #{_conv3x3_bias.1} parent=23 // pred_fallthru
        _
    $region24: #{_conv3x3_bias.1} parent=5 // pred_fallthru
      _
    %p266 = scmp.le.s32.totalorder 1, %s11
    %p267 = scmp.lt.s32.totalorder %s11, 5
    %p268 = pnand %p266, %p267
    %p269 = pneg %p268
    // Predicated region
    $region37: #{_conv3x3_bias.1} parent=5 // pred_check
      _
    $region38: #{_conv3x3_bias.1} parent=5 // pred_check_branch
      %271 = sbr.rel (%p268) target = $region40
    $region39: #{_conv3x3_bias.1} parent=5 // pred_region
      %s272 = ssub.s32 %s11, 1
      %s273 = smul.u32 8, %s21
      %s274 = ssub.s32 18, %s273
      %p275 = scmp.lt.s32.totalorder %s274, 8
      %s276 = scalar_select %p275, %s274, 8
      %s277 = smul.u32 128, %s276
      %s278 = smul.u32 %s277, 3
      %p279 = scmp.lt.s32.totalorder %s20, 1
      %s280 = scalar_select %p279, %s20, 1
      %p281 = scmp.lt.s32.totalorder %s273, 17
      %s282 = scalar_select %p281, %s273, 17
      %s283 = smul.addr %s282, 3
      %s284 = smul.addr %s280, 54
      %s285 = sadd.s32 %s283, %s284
      %s286 = smul.addr %s285, 8
      %s287 = scalar_lea.vmem %s0, %s286
      %p288 = pneg %p51
      %p289 = pneg %p48
      %s290 = smul.u32 %s21, 8
      %s291 = sadd.s32 %s290, 8
      %p292 = scmp.lt.s32.totalorder %s20, 1
      %s293 = scalar_select %p292, %s20, 1
      %p294 = scmp.lt.s32.totalorder %s291, 17
      %s295 = scalar_select %p294, %s291, 17
      %s296 = smul.addr %s295, 3
      %s297 = smul.addr %s293, 54
      %s298 = sadd.s32 %s296, %s297
      %s299 = smul.addr %s298, 8
      %s300 = scalar_lea.vmem %s1, %s299
      %p301 = pneg %p83
      %p302 = pneg %p80
      %s303 = smul.u32 %s21, 8
      %s304 = sadd.s32 %s303, 9
      %p305 = scmp.lt.s32.totalorder %s20, 1
      %s306 = scalar_select %p305, %s20, 1
      %p307 = scmp.lt.s32.totalorder %s304, 17
      %s308 = scalar_select %p307, %s304, 17
      %s309 = smul.addr %s308, 3
      %s310 = smul.addr %s306, 54
      %s311 = sadd.s32 %s309, %s310
      %s312 = smul.addr %s311, 8
      %s313 = scalar_lea.vmem %s2, %s312
      %p314 = pneg %p115
      %p315 = pneg %p112
      %p316 = pneg %p136
      %p317 = pneg %p133
      %p318 = pneg %p157
      %p319 = pneg %p154
      %p320 = pneg %p185
      %p321 = pneg %p182
      %s322 = smul.u32 8, %s21
      %p323 = scmp.lt.s32.totalorder %s20, 1
      %s324 = scalar_select %p323, %s20, 1
      %p325 = scmp.lt.s32.totalorder %s322, 15
      %s326 = scalar_select %p325, %s322, 15
      %s327 = smul.addr %s326, 2
      %s328 = smul.addr %s324, 32
      %s329 = sadd.s32 %s327, %s328
      %s330 = smul.addr %s329, 8
      %s331 = scalar_lea.vmem %s5, %s330
      %s332 = smul.u32 8, %s21
      %s333 = ssub.s32 18, %s332
      %p334 = scmp.lt.s32.totalorder %s333, 8
      %s335 = scalar_select %p334, %s333, 8
      %s336 = smul.u32 128, %s335
      %s337 = smul.u32 %s336, 3
      %p338 = scmp.lt.s32.totalorder %s20, 1
      %s339 = scalar_select %p338, %s20, 1
      %p340 = scmp.lt.s32.totalorder %s332, 17
      %s341 = scalar_select %p340, %s332, 17
      %s342 = smul.addr %s341, 3
      %s343 = smul.addr %s339, 54
      %s344 = sadd.s32 %s342, %s343
      %s345 = smul.addr %s344, 8
      %s346 = scalar_lea.vmem %s0, %s345
      %s347 = smul.u32 8, %s21
      %s348 = ssub.s32 18, %s347
      %p349 = scmp.lt.s32.totalorder %s348, 8
      %s350 = scalar_select %p349, %s348, 8
      %s351 = smul.u32 128, %s350
      %s352 = smul.u32 %s351, 3
      %s353 = smul.u32 %s21, 8
      %s354 = sadd.s32 %s353, 8
      %p355 = scmp.lt.s32.totalorder %s20, 1
      %s356 = scalar_select %p355, %s20, 1
      %p357 = scmp.lt.s32.totalorder %s354, 17
      %s358 = scalar_select %p357, %s354, 17
      %s359 = smul.addr %s358, 3
      %s360 = smul.addr %s356, 54
      %s361 = sadd.s32 %s359, %s360
      %s362 = smul.addr %s361, 8
      %s363 = scalar_lea.vmem %s1, %s362
      %s364 = smul.u32 %s21, 8
      %s365 = sadd.s32 %s364, 8
      %s366 = smul.u32 %s21, 8
      %s367 = sadd.s32 %s366, 9
      %p368 = scmp.lt.s32.totalorder %s20, 1
      %s369 = scalar_select %p368, %s20, 1
      %p370 = scmp.lt.s32.totalorder %s367, 17
      %s371 = scalar_select %p370, %s367, 17
      %s372 = smul.addr %s371, 3
      %s373 = smul.addr %s369, 54
      %s374 = sadd.s32 %s372, %s373
      %s375 = smul.addr %s374, 8
      %s376 = scalar_lea.vmem %s2, %s375
      %s377 = smul.u32 %s21, 8
      %s378 = sadd.s32 %s377, 9
      %s379 = smul.u32 8, %s21
      %p380 = scmp.lt.s32.totalorder %s20, 1
      %s381 = scalar_select %p380, %s20, 1
      %p382 = scmp.lt.s32.totalorder %s379, 15
      %s383 = scalar_select %p382, %s379, 15
      %s384 = smul.addr %s383, 2
      %s385 = smul.addr %s381, 32
      %s386 = sadd.s32 %s384, %s385
      %s387 = smul.addr %s386, 8
      %s388 = scalar_lea.vmem %s5, %s387
      %s389 = smul.u32 8, %s21
      %v390 = vld [vmem:[%s346] sm:$0xff]
      %v391 = vld [vmem:[%s346 + $0x8] sm:$0xff]
      %v392 = vld [vmem:[%s346 + $0x10] sm:$0x3]
      %v393 = vld [vmem:[%s346 + $0x18] sm:$0xff]
      %v394 = vld [vmem:[%s346 + $0x20] sm:$0xff]
      %v395 = vld [vmem:[%s346 + $0x28] sm:$0x3]
      %v396 = vld [vmem:[%s346 + $0x30] sm:$0xff]
      %v397 = vld [vmem:[%s346 + $0x38] sm:$0xff]
      %v398 = vld [vmem:[%s346 + $0x40] sm:$0x3]
      %v399 = vld [vmem:[%s346 + $0x48] sm:$0xff]
      %v400 = vld [vmem:[%s346 + $0x50] sm:$0xff]
      %v401 = vld [vmem:[%s346 + $0x58] sm:$0x3]
      %v402 = vld [vmem:[%s346 + $0x60] sm:$0xff]
      %v403 = vld [vmem:[%s346 + $0x68] sm:$0xff]
      %v404 = vld [vmem:[%s346 + $0x70] sm:$0x3]
      %v405 = vld [vmem:[%s346 + $0x78] sm:$0xff]
      %v406 = vld [vmem:[%s346 + $0x80] sm:$0xff]
      %v407 = vld [vmem:[%s346 + $0x88] sm:$0x3]
      %v408 = vld [vmem:[%s346 + $0x90] sm:$0xff]
      %v409 = vld [vmem:[%s346 + $0x98] sm:$0xff]
      %v410 = vld [vmem:[%s346 + $0xa0] sm:$0x3]
      %v411 = vld [vmem:[%s346 + $0xa8] sm:$0xff]
      %v412 = vld [vmem:[%s346 + $0xb0] sm:$0xff]
      %v413 = vld [vmem:[%s346 + $0xb8] sm:$0x3]
      %vm414 = vcmask 31744
      %415 = vst.msk [vmem:[#allocation2] sm:$0xff] %vm414, %v390
      %416 = vst.msk [vmem:[#allocation2 + $0x8] sm:$0xff] %vm414, %v391
      %vm417 = vcmask 25600
      %418 = vst.msk [vmem:[#allocation2 + $0x10] sm:$0x3] %vm417, %v392
      %419 = vst.msk [vmem:[#allocation2 + $0x18] sm:$0xff] %vm414, %v393
      %420 = vst.msk [vmem:[#allocation2 + $0x20] sm:$0xff] %vm414, %v394
      %421 = vst.msk [vmem:[#allocation2 + $0x28] sm:$0x3] %vm417, %v395
      %422 = vst.msk [vmem:[#allocation2 + $0x30] sm:$0xff] %vm414, %v396
      %423 = vst.msk [vmem:[#allocation2 + $0x38] sm:$0xff] %vm414, %v397
      %424 = vst.msk [vmem:[#allocation2 + $0x40] sm:$0x3] %vm417, %v398
      %425 = vst.msk [vmem:[#allocation2 + $0x48] sm:$0xff] %vm414, %v399
      %426 = vst.msk [vmem:[#allocation2 + $0x50] sm:$0xff] %vm414, %v400
      %427 = vst.msk [vmem:[#allocation2 + $0x58] sm:$0x3] %vm417, %v401
      %428 = vst.msk [vmem:[#allocation2 + $0x60] sm:$0xff] %vm414, %v402
      %429 = vst.msk [vmem:[#allocation2 + $0x68] sm:$0xff] %vm414, %v403
      %430 = vst.msk [vmem:[#allocation2 + $0x70] sm:$0x3] %vm417, %v404
      %431 = vst.msk [vmem:[#allocation2 + $0x78] sm:$0xff] %vm414, %v405
      %432 = vst.msk [vmem:[#allocation2 + $0x80] sm:$0xff] %vm414, %v406
      %433 = vst.msk [vmem:[#allocation2 + $0x88] sm:$0x3] %vm417, %v407
      %434 = vst.msk [vmem:[#allocation2 + $0x90] sm:$0xff] %vm414, %v408
      %435 = vst.msk [vmem:[#allocation2 + $0x98] sm:$0xff] %vm414, %v409
      %436 = vst.msk [vmem:[#allocation2 + $0xa0] sm:$0x3] %vm417, %v410
      %437 = vst.msk [vmem:[#allocation2 + $0xa8] sm:$0xff] %vm414, %v411
      %438 = vst.msk [vmem:[#allocation2 + $0xb0] sm:$0xff] %vm414, %v412
      %439 = vst.msk [vmem:[#allocation2 + $0xb8] sm:$0x3] %vm417, %v413
      %v440 = vld [vmem:[%s363] sm:$0xff]
      %v441 = vld [vmem:[%s363 + $0x8] sm:$0xff]
      %v442 = vld [vmem:[%s363 + $0x10] sm:$0x3]
      %s443 = scalar_lea.vmem [#allocation2], 192
      %444 = vst.msk [vmem:[%s443] sm:$0xff] %vm414, %v440
      %445 = vst.msk [vmem:[%s443 + $0x8] sm:$0xff] %vm414, %v441
      %446 = vst.msk [vmem:[%s443 + $0x10] sm:$0x3] %vm417, %v442
      %v447 = vld [vmem:[%s376] sm:$0xff]
      %v448 = vld [vmem:[%s376 + $0x8] sm:$0xff]
      %v449 = vld [vmem:[%s376 + $0x10] sm:$0x3]
      %s450 = scalar_lea.vmem [#allocation2], 216
      %451 = vst.msk [vmem:[%s450] sm:$0xff] %vm414, %v447
      %452 = vst.msk [vmem:[%s450 + $0x8] sm:$0xff] %vm414, %v448
      %453 = vst.msk [vmem:[%s450 + $0x10] sm:$0x3] %vm417, %v449
      %vm454 = vcmask 64512
      %455 = vst.msk [vmem:[#allocation3] sm:$0xff] %vm454, 0.0
      %456 = vst.msk [vmem:[#allocation3 + $0x8] sm:$0xff] %vm454, 0.0
      %457 = vst.msk [vmem:[#allocation3 + $0x10] sm:$0xff] %vm454, 0.0
      %458 = vst.msk [vmem:[#allocation3 + $0x18] sm:$0xff] %vm454, 0.0
      %459 = vst.msk [vmem:[#allocation3 + $0x20] sm:$0xff] %vm454, 0.0
      %460 = vst.msk [vmem:[#allocation3 + $0x28] sm:$0xff] %vm454, 0.0
      %461 = vst.msk [vmem:[#allocation3 + $0x30] sm:$0xff] %vm454, 0.0
      %462 = vst.msk [vmem:[#allocation3 + $0x38] sm:$0xff] %vm454, 0.0
      %463 = vst.msk [vmem:[#allocation3 + $0x40] sm:$0xff] %vm454, 0.0
      %464 = vst.msk [vmem:[#allocation3 + $0x48] sm:$0xff] %vm454, 0.0
      %465 = vst.msk [vmem:[#allocation3 + $0x50] sm:$0xff] %vm454, 0.0
      %466 = vst.msk [vmem:[#allocation3 + $0x58] sm:$0xff] %vm454, 0.0
      %467 = vst.msk [vmem:[#allocation3 + $0x60] sm:$0xff] %vm454, 0.0
      %468 = vst.msk [vmem:[#allocation3 + $0x68] sm:$0xff] %vm454, 0.0
      %469 = vst.msk [vmem:[#allocation3 + $0x70] sm:$0xff] %vm454, 0.0
      %470 = vst.msk [vmem:[#allocation3 + $0x78] sm:$0xff] %vm454, 0.0
      %v471 = vld [vmem:[#allocation2] sm:$0xff]
      %v472 = vld [vmem:[#allocation2 + $0x8] sm:$0xff]
      %v473 = vld [vmem:[#allocation2 + $0x10] sm:$0x3]
      %v474 = vld [vmem:[#allocation2 + $0x18] sm:$0xff]
      %v475 = vld [vmem:[#allocation2 + $0x20] sm:$0xff]
      %v476 = vld [vmem:[#allocation2 + $0x28] sm:$0x3]
      %v477 = vld [vmem:[#allocation2 + $0x30] sm:$0xff]
      %v478 = vld [vmem:[#allocation2 + $0x38] sm:$0xff]
      %v479 = vld [vmem:[#allocation2 + $0x40] sm:$0x3]
      %v480 = vld [vmem:[#allocation2 + $0x48] sm:$0xff]
      %v481 = vld [vmem:[#allocation2 + $0x50] sm:$0xff]
      %v482 = vld [vmem:[#allocation2 + $0x58] sm:$0x3]
      %v483 = vld [vmem:[#allocation2 + $0x60] sm:$0xff]
      %v484 = vld [vmem:[#allocation2 + $0x68] sm:$0xff]
      %v485 = vld [vmem:[#allocation2 + $0x70] sm:$0x3]
      %v486 = vld [vmem:[#allocation2 + $0x78] sm:$0xff]
      %v487 = vld [vmem:[#allocation2 + $0x80] sm:$0xff]
      %v488 = vld [vmem:[#allocation2 + $0x88] sm:$0x3]
      %v489 = vld [vmem:[#allocation2 + $0x90] sm:$0xff]
      %v490 = vld [vmem:[#allocation2 + $0x98] sm:$0xff]
      %v491 = vld [vmem:[#allocation2 + $0xa0] sm:$0x3]
      %v492 = vld [vmem:[#allocation2 + $0xa8] sm:$0xff]
      %v493 = vld [vmem:[#allocation2 + $0xb0] sm:$0xff]
      %v494 = vld [vmem:[#allocation2 + $0xb8] sm:$0x3]
      %v495 = vld [vmem:[#allocation2 + $0xc0] sm:$0xff]
      %v496 = vld [vmem:[#allocation2 + $0xc8] sm:$0xff]
      %v497 = vld [vmem:[#allocation2 + $0xd0] sm:$0x3]
      %v498 = vld [vmem:[#allocation2 + $0xd8] sm:$0xff]
      %v499 = vld [vmem:[#allocation2 + $0xe0] sm:$0xff]
      %v500 = vld [vmem:[#allocation2 + $0xe8] sm:$0x3]
      %v501 = vld [vmem:[#allocation3] sm:$0xff]
      %v502 = vld [vmem:[#allocation3 + $0x8] sm:$0xff]
      %v503 = vld [vmem:[#allocation3 + $0x10] sm:$0xff]
      %v504 = vld [vmem:[#allocation3 + $0x18] sm:$0xff]
      %v505 = vld [vmem:[#allocation3 + $0x20] sm:$0xff]
      %v506 = vld [vmem:[#allocation3 + $0x28] sm:$0xff]
      %v507 = vld [vmem:[#allocation3 + $0x30] sm:$0xff]
      %v508 = vld [vmem:[#allocation3 + $0x38] sm:$0xff]
      %v509 = vld [vmem:[#allocation3 + $0x40] sm:$0xff]
      %v510 = vld [vmem:[#allocation3 + $0x48] sm:$0xff]
      %v511 = vld [vmem:[#allocation3 + $0x50] sm:$0xff]
      %v512 = vld [vmem:[#allocation3 + $0x58] sm:$0xff]
      %v513 = vld [vmem:[#allocation3 + $0x60] sm:$0xff]
      %v514 = vld [vmem:[#allocation3 + $0x68] sm:$0xff]
      %v515 = vld [vmem:[#allocation3 + $0x70] sm:$0xff]
      %v516 = vld [vmem:[#allocation3 + $0x78] sm:$0xff]
      %v517 = vld [vmem:[%s3] sm:$0xf]
      %v519 = vsel %vm414, %v471, 0
      %v522 = vsel %vm414, %v472, 0
      %v525 = vsel %vm414, %v474, 0
      %v528 = vsel %vm414, %v475, 0
      %v531 = vsel %vm414, %v477, 0
      %v534 = vsel %vm414, %v478, 0
      %v537 = vsel %vm414, %v480, 0
      %v540 = vsel %vm414, %v481, 0
      %v543 = vsel %vm414, %v483, 0
      %v546 = vsel %vm414, %v484, 0
      %v549 = vsel %vm414, %v486, 0
      %v552 = vsel %vm414, %v487, 0
      %v555 = vsel %vm414, %v489, 0
      %v558 = vsel %vm414, %v490, 0
      %v561 = vsel %vm414, %v492, 0
      %v564 = vsel %vm414, %v493, 0
      %vm566 = vcmask 1043456
      %v568 = vsel %vm566, %v517, 0
      %570 = vmatprep.subr.mxu0 0.0
      %571 = vmatpush1.msra.mxu0 0.0
      %572 = vmatprep.subr.mxu0 0.0
      %573 = vmatpush1.msra.mxu0 0.0
      %574 = vmatprep.subr.mxu0 0.0
      %575 = vmatpush1.msra.mxu0 0.0
      %576 = vmatprep.subr.mxu0 0.0
      %577 = vmatpush1.msra.mxu0 0.0
      %578 = vmatprep.subr.mxu0 0.0
      %579 = vmatpush1.msra.mxu0 0.0
      %580 = vmatprep.subr.mxu0 0.0
      %581 = vmatpush1.msra.mxu0 0.0
      %582 = vmatprep.subr.mxu0 0.0
      %583 = vmatpush1.msra.mxu0 0.0
      %584 = vmatprep.subr.mxu0 0.0
      %585 = vmatpush1.msra.mxu0 0.0
      %586 = vmatprep.subr.mxu0 0.0
      %587 = vmatpush1.msra.mxu0 0.0
      %588 = vmatprep.subr.mxu0 0.0
      %589 = vmatpush1.msra.mxu0 0.0
      %590 = vmatprep.subr.mxu0 0.0
      %591 = vmatpush1.msra.mxu0 0.0
      %592 = vmatprep.subr.mxu0 0.0
      %593 = vmatpush1.msra.mxu0 0.0
      %594 = vmatprep.subr.mxu0 0.0
      %595 = vmatpush1.msra.mxu0 0.0
      %596 = vmatprep.subr.mxu0 0.0
      %597 = vmatpush1.msra.mxu0 0.0
      %598 = vmatprep.subr.mxu0 0.0
      %599 = vmatpush1.msra.mxu0 0.0
      %600 = vmatprep.subr.mxu0 0.0
      %601 = vmatpush1.msra.mxu0 %v568
      %602 = vmatprep.subr.mxu0 0.0
      %603 = vmatpush2.msra.mxu0 0.0
      %604 = vmatprep.subr.mxu0 0.0
      %605 = vmatpush2.msra.mxu0 0.0
      %606 = vmatprep.subr.mxu0 0.0
      %607 = vmatpush2.msra.mxu0 0.0
      %608 = vmatprep.subr.mxu0 0.0
      %609 = vmatpush2.msra.mxu0 0.0
      %610 = vmatprep.subr.mxu0 0.0
      %611 = vmatpush2.msra.mxu0 0.0
      %612 = vmatprep.subr.mxu0 0.0
      %613 = vmatpush2.msra.mxu0 0.0
      %614 = vmatprep.subr.mxu0 0.0
      %615 = vmatpush2.msra.mxu0 0.0
      %616 = vmatprep.subr.mxu0 0.0
      %617 = vmatpush2.msra.mxu0 0.0
      %618 = vmatprep.subr.mxu0 0.0
      %619 = vmatpush2.msra.mxu0 0.0
      %620 = vmatprep.subr.mxu0 0.0
      %621 = vmatpush2.msra.mxu0 0.0
      %622 = vmatprep.subr.mxu0 0.0
      %623 = vmatpush2.msra.mxu0 0.0
      %624 = vmatprep.subr.mxu0 0.0
      %625 = vmatpush2.msra.mxu0 0.0
      %626 = vmatprep.subr.mxu0 0.0
      %627 = vmatpush2.msra.mxu0 0.0
      %628 = vmatprep.subr.mxu0 0.0
      %629 = vmatpush2.msra.mxu0 0.0
      %630 = vmatprep.subr.mxu0 0.0
      %631 = vmatpush2.msra.mxu0 0.0
      %632 = vmatprep.subr.mxu0 0.0
      %633 = vmatpush2.msra.mxu0 0.0
      %634 = vmatprep.mubr.f32.mxu0 0.0
      %635 = vmatmul.mubr.f32.gmra.mxu0 %v519
      %v636 = vpop.f32.mrf.mxu0
      %v637 = vadd.f32 0.0, %v636
      %v638 = vpop.f32.mrf.mxu0
      %639 = vmatprep.mubr.f32.mxu0 0.0
      %640 = vmatmul.mubr.f32.gmra.mxu0 %v522
      %v641 = vpop.f32.mrf.mxu0
      %v642 = vadd.f32 0.0, %v641
      %v643 = vpop.f32.mrf.mxu0
      %644 = vmatprep.mubr.f32.mxu0 0.0
      %645 = vmatmul.mubr.f32.gmra.mxu0 %v525
      %v646 = vpop.f32.mrf.mxu0
      %v647 = vadd.f32 0.0, %v646
      %v648 = vpop.f32.mrf.mxu0
      %649 = vmatprep.mubr.f32.mxu0 0.0
      %650 = vmatmul.mubr.f32.gmra.mxu0 %v528
      %v651 = vpop.f32.mrf.mxu0
      %v652 = vadd.f32 0.0, %v651
      %v653 = vpop.f32.mrf.mxu0
      %654 = vmatprep.mubr.f32.mxu0 0.0
      %655 = vmatmul.mubr.f32.gmra.mxu0 %v531
      %v656 = vpop.f32.mrf.mxu0
      %v657 = vadd.f32 0.0, %v656
      %v658 = vpop.f32.mrf.mxu0
      %659 = vmatprep.mubr.f32.mxu0 0.0
      %660 = vmatmul.mubr.f32.gmra.mxu0 %v534
      %v661 = vpop.f32.mrf.mxu0
      %v662 = vadd.f32 0.0, %v661
      %v663 = vpop.f32.mrf.mxu0
      %664 = vmatprep.mubr.f32.mxu0 0.0
      %665 = vmatmul.mubr.f32.gmra.mxu0 %v537
      %v666 = vpop.f32.mrf.mxu0
      %v667 = vadd.f32 0.0, %v666
      %v668 = vpop.f32.mrf.mxu0
      %669 = vmatprep.mubr.f32.mxu0 0.0
      %670 = vmatmul.mubr.f32.gmra.mxu0 %v540
      %v671 = vpop.f32.mrf.mxu0
      %v672 = vadd.f32 0.0, %v671
      %v673 = vpop.f32.mrf.mxu0
      %674 = vmatprep.mubr.f32.mxu0 0.0
      %675 = vmatmul.mubr.f32.gmra.mxu0 %v543
      %v676 = vpop.f32.mrf.mxu0
      %v677 = vadd.f32 0.0, %v676
      %v678 = vpop.f32.mrf.mxu0
      %679 = vmatprep.mubr.f32.mxu0 0.0
      %680 = vmatmul.mubr.f32.gmra.mxu0 %v546
      %v681 = vpop.f32.mrf.mxu0
      %v682 = vadd.f32 0.0, %v681
      %v683 = vpop.f32.mrf.mxu0
      %684 = vmatprep.mubr.f32.mxu0 0.0
      %685 = vmatmul.mubr.f32.gmra.mxu0 %v549
      %v686 = vpop.f32.mrf.mxu0
      %v687 = vadd.f32 0.0, %v686
      %v688 = vpop.f32.mrf.mxu0
      %689 = vmatprep.mubr.f32.mxu0 0.0
      %690 = vmatmul.mubr.f32.gmra.mxu0 %v552
      %v691 = vpop.f32.mrf.mxu0
      %v692 = vadd.f32 0.0, %v691
      %v693 = vpop.f32.mrf.mxu0
      %694 = vmatprep.mubr.f32.mxu0 0.0
      %695 = vmatmul.mubr.f32.gmra.mxu0 %v555
      %v696 = vpop.f32.mrf.mxu0
      %v697 = vadd.f32 0.0, %v696
      %v698 = vpop.f32.mrf.mxu0
      %699 = vmatprep.mubr.f32.mxu0 0.0
      %700 = vmatmul.mubr.f32.gmra.mxu0 %v558
      %v701 = vpop.f32.mrf.mxu0
      %v702 = vadd.f32 0.0, %v701
      %v703 = vpop.f32.mrf.mxu0
      %704 = vmatprep.mubr.f32.mxu0 0.0
      %705 = vmatmul.mubr.f32.gmra.mxu0 %v561
      %v706 = vpop.f32.mrf.mxu0
      %v707 = vadd.f32 0.0, %v706
      %v708 = vpop.f32.mrf.mxu0
      %709 = vmatprep.mubr.f32.mxu0 0.0
      %710 = vmatmul.mubr.f32.gmra.mxu0 %v564
      %v711 = vpop.f32.mrf.mxu0
      %v712 = vadd.f32 0.0, %v711
      %v713 = vpop.f32.mrf.mxu0
      %714 = vdwg.mxu0
      %v715 = vadd.f32 %v501, %v637
      %v716 = vadd.f32 %v502, %v642
      %v717 = vadd.f32 %v503, %v647
      %v718 = vadd.f32 %v504, %v652
      %v719 = vadd.f32 %v505, %v657
      %v720 = vadd.f32 %v506, %v662
      %v721 = vadd.f32 %v507, %v667
      %v722 = vadd.f32 %v508, %v672
      %v723 = vadd.f32 %v509, %v677
      %v724 = vadd.f32 %v510, %v682
      %v725 = vadd.f32 %v511, %v687
      %v726 = vadd.f32 %v512, %v692
      %v727 = vadd.f32 %v513, %v697
      %v728 = vadd.f32 %v514, %v702
      %v729 = vadd.f32 %v515, %v707
      %v730 = vadd.f32 %v516, %v712
      %731 = vst.msk [vmem:[#allocation3] sm:$0xff] %vm454, %v715
      %732 = vst.msk [vmem:[#allocation3 + $0x8] sm:$0xff] %vm454, %v716
      %733 = vst.msk [vmem:[#allocation3 + $0x10] sm:$0xff] %vm454, %v717
      %734 = vst.msk [vmem:[#allocation3 + $0x18] sm:$0xff] %vm454, %v718
      %735 = vst.msk [vmem:[#allocation3 + $0x20] sm:$0xff] %vm454, %v719
      %736 = vst.msk [vmem:[#allocation3 + $0x28] sm:$0xff] %vm454, %v720
      %737 = vst.msk [vmem:[#allocation3 + $0x30] sm:$0xff] %vm454, %v721
      %738 = vst.msk [vmem:[#allocation3 + $0x38] sm:$0xff] %vm454, %v722
      %739 = vst.msk [vmem:[#allocation3 + $0x40] sm:$0xff] %vm454, %v723
      %740 = vst.msk [vmem:[#allocation3 + $0x48] sm:$0xff] %vm454, %v724
      %741 = vst.msk [vmem:[#allocation3 + $0x50] sm:$0xff] %vm454, %v725
      %742 = vst.msk [vmem:[#allocation3 + $0x58] sm:$0xff] %vm454, %v726
      %743 = vst.msk [vmem:[#allocation3 + $0x60] sm:$0xff] %vm454, %v727
      %744 = vst.msk [vmem:[#allocation3 + $0x68] sm:$0xff] %vm454, %v728
      %745 = vst.msk [vmem:[#allocation3 + $0x70] sm:$0xff] %vm454, %v729
      %746 = vst.msk [vmem:[#allocation3 + $0x78] sm:$0xff] %vm454, %v730
      %v747 = vld [vmem:[#allocation3] sm:$0xff]
      %v748 = vld [vmem:[#allocation3 + $0x8] sm:$0xff]
      %v749 = vld [vmem:[#allocation3 + $0x10] sm:$0xff]
      %v750 = vld [vmem:[#allocation3 + $0x18] sm:$0xff]
      %v751 = vld [vmem:[#allocation3 + $0x20] sm:$0xff]
      %v752 = vld [vmem:[#allocation3 + $0x28] sm:$0xff]
      %v753 = vld [vmem:[#allocation3 + $0x30] sm:$0xff]
      %v754 = vld [vmem:[#allocation3 + $0x38] sm:$0xff]
      %v755 = vld [vmem:[#allocation3 + $0x40] sm:$0xff]
      %v756 = vld [vmem:[#allocation3 + $0x48] sm:$0xff]
      %v757 = vld [vmem:[#allocation3 + $0x50] sm:$0xff]
      %v758 = vld [vmem:[#allocation3 + $0x58] sm:$0xff]
      %v759 = vld [vmem:[#allocation3 + $0x60] sm:$0xff]
      %v760 = vld [vmem:[#allocation3 + $0x68] sm:$0xff]
      %v761 = vld [vmem:[#allocation3 + $0x70] sm:$0xff]
      %v762 = vld [vmem:[#allocation3 + $0x78] sm:$0xff]
      %s763 = scalar_lea.vmem %s3, 12
      %v764 = vld [vmem:[%s763] sm:$0xf]
      %v766 = vsel %vm414, %v495, 0
      %v769 = vsel %vm414, %v496, 0
      %v772 = vsel %vm566, %v764, 0
      %774 = vmatprep.subr.mxu0 0.0
      %775 = vmatpush1.msra.mxu0 0.0
      %776 = vmatprep.subr.mxu0 0.0
      %777 = vmatpush1.msra.mxu0 0.0
      %778 = vmatprep.subr.mxu0 0.0
      %779 = vmatpush1.msra.mxu0 0.0
      %780 = vmatprep.subr.mxu0 0.0
      %781 = vmatpush1.msra.mxu0 0.0
      %782 = vmatprep.subr.mxu0 0.0
      %783 = vmatpush1.msra.mxu0 0.0
      %784 = vmatprep.subr.mxu0 0.0
      %785 = vmatpush1.msra.mxu0 0.0
      %786 = vmatprep.subr.mxu0 0.0
      %787 = vmatpush1.msra.mxu0 0.0
      %788 = vmatprep.subr.mxu0 0.0
      %789 = vmatpush1.msra.mxu0 0.0
      %790 = vmatprep.subr.mxu0 0.0
      %791 = vmatpush1.msra.mxu0 0.0
      %792 = vmatprep.subr.mxu0 0.0
      %793 = vmatpush1.msra.mxu0 0.0
      %794 = vmatprep.subr.mxu0 0.0
      %795 = vmatpush1.msra.mxu0 0.0
      %796 = vmatprep.subr.mxu0 0.0
      %797 = vmatpush1.msra.mxu0 0.0
      %798 = vmatprep.subr.mxu0 0.0
      %799 = vmatpush1.msra.mxu0 0.0
      %800 = vmatprep.subr.mxu0 0.0
      %801 = vmatpush1.msra.mxu0 0.0
      %802 = vmatprep.subr.mxu0 0.0
      %803 = vmatpush1.msra.mxu0 0.0
      %804 = vmatprep.subr.mxu0 0.0
      %805 = vmatpush1.msra.mxu0 %v772
      %806 = vmatprep.subr.mxu0 0.0
      %807 = vmatpush2.msra.mxu0 0.0
      %808 = vmatprep.subr.mxu0 0.0
      %809 = vmatpush2.msra.mxu0 0.0
      %810 = vmatprep.subr.mxu0 0.0
      %811 = vmatpush2.msra.mxu0 0.0
      %812 = vmatprep.subr.mxu0 0.0
      %813 = vmatpush2.msra.mxu0 0.0
      %814 = vmatprep.subr.mxu0 0.0
      %815 = vmatpush2.msra.mxu0 0.0
      %816 = vmatprep.subr.mxu0 0.0
      %817 = vmatpush2.msra.mxu0 0.0
      %818 = vmatprep.subr.mxu0 0.0
      %819 = vmatpush2.msra.mxu0 0.0
      %820 = vmatprep.subr.mxu0 0.0
      %821 = vmatpush2.msra.mxu0 0.0
      %822 = vmatprep.subr.mxu0 0.0
      %823 = vmatpush2.msra.mxu0 0.0
      %824 = vmatprep.subr.mxu0 0.0
      %825 = vmatpush2.msra.mxu0 0.0
      %826 = vmatprep.subr.mxu0 0.0
      %827 = vmatpush2.msra.mxu0 0.0
      %828 = vmatprep.subr.mxu0 0.0
      %829 = vmatpush2.msra.mxu0 0.0
      %830 = vmatprep.subr.mxu0 0.0
      %831 = vmatpush2.msra.mxu0 0.0
      %832 = vmatprep.subr.mxu0 0.0
      %833 = vmatpush2.msra.mxu0 0.0
      %834 = vmatprep.subr.mxu0 0.0
      %835 = vmatpush2.msra.mxu0 0.0
      %836 = vmatprep.subr.mxu0 0.0
      %837 = vmatpush2.msra.mxu0 0.0
      %838 = vmatprep.mubr.f32.mxu0 0.0
      %839 = vmatmul.mubr.f32.gmra.mxu0 %v525
      %v840 = vpop.f32.mrf.mxu0
      %v841 = vadd.f32 0.0, %v840
      %v842 = vpop.f32.mrf.mxu0
      %843 = vmatprep.mubr.f32.mxu0 0.0
      %844 = vmatmul.mubr.f32.gmra.mxu0 %v528
      %v845 = vpop.f32.mrf.mxu0
      %v846 = vadd.f32 0.0, %v845
      %v847 = vpop.f32.mrf.mxu0
      %848 = vmatprep.mubr.f32.mxu0 0.0
      %849 = vmatmul.mubr.f32.gmra.mxu0 %v531
      %v850 = vpop.f32.mrf.mxu0
      %v851 = vadd.f32 0.0, %v850
      %v852 = vpop.f32.mrf.mxu0
      %853 = vmatprep.mubr.f32.mxu0 0.0
      %854 = vmatmul.mubr.f32.gmra.mxu0 %v534
      %v855 = vpop.f32.mrf.mxu0
      %v856 = vadd.f32 0.0, %v855
      %v857 = vpop.f32.mrf.mxu0
      %858 = vmatprep.mubr.f32.mxu0 0.0
      %859 = vmatmul.mubr.f32.gmra.mxu0 %v537
      %v860 = vpop.f32.mrf.mxu0
      %v861 = vadd.f32 0.0, %v860
      %v862 = vpop.f32.mrf.mxu0
      %863 = vmatprep.mubr.f32.mxu0 0.0
      %864 = vmatmul.mubr.f32.gmra.mxu0 %v540
      %v865 = vpop.f32.mrf.mxu0
      %v866 = vadd.f32 0.0, %v865
      %v867 = vpop.f32.mrf.mxu0
      %868 = vmatprep.mubr.f32.mxu0 0.0
      %869 = vmatmul.mubr.f32.gmra.mxu0 %v543
      %v870 = vpop.f32.mrf.mxu0
      %v871 = vadd.f32 0.0, %v870
      %v872 = vpop.f32.mrf.mxu0
      %873 = vmatprep.mubr.f32.mxu0 0.0
      %874 = vmatmul.mubr.f32.gmra.mxu0 %v546
      %v875 = vpop.f32.mrf.mxu0
      %v876 = vadd.f32 0.0, %v875
      %v877 = vpop.f32.mrf.mxu0
      %878 = vmatprep.mubr.f32.mxu0 0.0
      %879 = vmatmul.mubr.f32.gmra.mxu0 %v549
      %v880 = vpop.f32.mrf.mxu0
      %v881 = vadd.f32 0.0, %v880
      %v882 = vpop.f32.mrf.mxu0
      %883 = vmatprep.mubr.f32.mxu0 0.0
      %884 = vmatmul.mubr.f32.gmra.mxu0 %v552
      %v885 = vpop.f32.mrf.mxu0
      %v886 = vadd.f32 0.0, %v885
      %v887 = vpop.f32.mrf.mxu0
      %888 = vmatprep.mubr.f32.mxu0 0.0
      %889 = vmatmul.mubr.f32.gmra.mxu0 %v555
      %v890 = vpop.f32.mrf.mxu0
      %v891 = vadd.f32 0.0, %v890
      %v892 = vpop.f32.mrf.mxu0
      %893 = vmatprep.mubr.f32.mxu0 0.0
      %894 = vmatmul.mubr.f32.gmra.mxu0 %v558
      %v895 = vpop.f32.mrf.mxu0
      %v896 = vadd.f32 0.0, %v895
      %v897 = vpop.f32.mrf.mxu0
      %898 = vmatprep.mubr.f32.mxu0 0.0
      %899 = vmatmul.mubr.f32.gmra.mxu0 %v561
      %v900 = vpop.f32.mrf.mxu0
      %v901 = vadd.f32 0.0, %v900
      %v902 = vpop.f32.mrf.mxu0
      %903 = vmatprep.mubr.f32.mxu0 0.0
      %904 = vmatmul.mubr.f32.gmra.mxu0 %v564
      %v905 = vpop.f32.mrf.mxu0
      %v906 = vadd.f32 0.0, %v905
      %v907 = vpop.f32.mrf.mxu0
      %908 = vmatprep.mubr.f32.mxu0 0.0
      %909 = vmatmul.mubr.f32.gmra.mxu0 %v766
      %v910 = vpop.f32.mrf.mxu0
      %v911 = vadd.f32 0.0, %v910
      %v912 = vpop.f32.mrf.mxu0
      %913 = vmatprep.mubr.f32.mxu0 0.0
      %914 = vmatmul.mubr.f32.gmra.mxu0 %v769
      %v915 = vpop.f32.mrf.mxu0
      %v916 = vadd.f32 0.0, %v915
      %v917 = vpop.f32.mrf.mxu0
      %918 = vdwg.mxu0
      %v919 = vadd.f32 %v747, %v841
      %v920 = vadd.f32 %v748, %v846
      %v921 = vadd.f32 %v749, %v851
      %v922 = vadd.f32 %v750, %v856
      %v923 = vadd.f32 %v751, %v861
      %v924 = vadd.f32 %v752, %v866
      %v925 = vadd.f32 %v753, %v871
      %v926 = vadd.f32 %v754, %v876
      %v927 = vadd.f32 %v755, %v881
      %v928 = vadd.f32 %v756, %v886
      %v929 = vadd.f32 %v757, %v891
      %v930 = vadd.f32 %v758, %v896
      %v931 = vadd.f32 %v759, %v901
      %v932 = vadd.f32 %v760, %v906
      %v933 = vadd.f32 %v761, %v911
      %v934 = vadd.f32 %v762, %v916
      %935 = vst.msk [vmem:[#allocation3] sm:$0xff] %vm454, %v919
      %936 = vst.msk [vmem:[#allocation3 + $0x8] sm:$0xff] %vm454, %v920
      %937 = vst.msk [vmem:[#allocation3 + $0x10] sm:$0xff] %vm454, %v921
      %938 = vst.msk [vmem:[#allocation3 + $0x18] sm:$0xff] %vm454, %v922
      %939 = vst.msk [vmem:[#allocation3 + $0x20] sm:$0xff] %vm454, %v923
      %940 = vst.msk [vmem:[#allocation3 + $0x28] sm:$0xff] %vm454, %v924
      %941 = vst.msk [vmem:[#allocation3 + $0x30] sm:$0xff] %vm454, %v925
      %942 = vst.msk [vmem:[#allocation3 + $0x38] sm:$0xff] %vm454, %v926
      %943 = vst.msk [vmem:[#allocation3 + $0x40] sm:$0xff] %vm454, %v927
      %944 = vst.msk [vmem:[#allocation3 + $0x48] sm:$0xff] %vm454, %v928
      %945 = vst.msk [vmem:[#allocation3 + $0x50] sm:$0xff] %vm454, %v929
      %946 = vst.msk [vmem:[#allocation3 + $0x58] sm:$0xff] %vm454, %v930
      %947 = vst.msk [vmem:[#allocation3 + $0x60] sm:$0xff] %vm454, %v931
      %948 = vst.msk [vmem:[#allocation3 + $0x68] sm:$0xff] %vm454, %v932
      %949 = vst.msk [vmem:[#allocation3 + $0x70] sm:$0xff] %vm454, %v933
      %950 = vst.msk [vmem:[#allocation3 + $0x78] sm:$0xff] %vm454, %v934
      %v951 = vld [vmem:[#allocation3] sm:$0xff]
      %v952 = vld [vmem:[#allocation3 + $0x8] sm:$0xff]
      %v953 = vld [vmem:[#allocation3 + $0x10] sm:$0xff]
      %v954 = vld [vmem:[#allocation3 + $0x18] sm:$0xff]
      %v955 = vld [vmem:[#allocation3 + $0x20] sm:$0xff]
      %v956 = vld [vmem:[#allocation3 + $0x28] sm:$0xff]
      %v957 = vld [vmem:[#allocation3 + $0x30] sm:$0xff]
      %v958 = vld [vmem:[#allocation3 + $0x38] sm:$0xff]
      %v959 = vld [vmem:[#allocation3 + $0x40] sm:$0xff]
      %v960 = vld [vmem:[#allocation3 + $0x48] sm:$0xff]
      %v961 = vld [vmem:[#allocation3 + $0x50] sm:$0xff]
      %v962 = vld [vmem:[#allocation3 + $0x58] sm:$0xff]
      %v963 = vld [vmem:[#allocation3 + $0x60] sm:$0xff]
      %v964 = vld [vmem:[#allocation3 + $0x68] sm:$0xff]
      %v965 = vld [vmem:[#allocation3 + $0x70] sm:$0xff]
      %v966 = vld [vmem:[#allocation3 + $0x78] sm:$0xff]
      %s967 = scalar_lea.vmem %s3, 24
      %v968 = vld [vmem:[%s967] sm:$0xf]
      %v970 = vsel %vm414, %v498, 0
      %v973 = vsel %vm414, %v499, 0
      %v976 = vsel %vm566, %v968, 0
      %978 = vmatprep.subr.mxu0 0.0
      %979 = vmatpush1.msra.mxu0 0.0
      %980 = vmatprep.subr.mxu0 0.0
      %981 = vmatpush1.msra.mxu0 0.0
      %982 = vmatprep.subr.mxu0 0.0
      %983 = vmatpush1.msra.mxu0 0.0
      %984 = vmatprep.subr.mxu0 0.0
      %985 = vmatpush1.msra.mxu0 0.0
      %986 = vmatprep.subr.mxu0 0.0
      %987 = vmatpush1.msra.mxu0 0.0
      %988 = vmatprep.subr.mxu0 0.0
      %989 = vmatpush1.msra.mxu0 0.0
      %990 = vmatprep.subr.mxu0 0.0
      %991 = vmatpush1.msra.mxu0 0.0
      %992 = vmatprep.subr.mxu0 0.0
      %993 = vmatpush1.msra.mxu0 0.0
      %994 = vmatprep.subr.mxu0 0.0
      %995 = vmatpush1.msra.mxu0 0.0
      %996 = vmatprep.subr.mxu0 0.0
      %997 = vmatpush1.msra.mxu0 0.0
      %998 = vmatprep.subr.mxu0 0.0
      %999 = vmatpush1.msra.mxu0 0.0
      %1000 = vmatprep.subr.mxu0 0.0
      %1001 = vmatpush1.msra.mxu0 0.0
      %1002 = vmatprep.subr.mxu0 0.0
      %1003 = vmatpush1.msra.mxu0 0.0
      %1004 = vmatprep.subr.mxu0 0.0
      %1005 = vmatpush1.msra.mxu0 0.0
      %1006 = vmatprep.subr.mxu0 0.0
      %1007 = vmatpush1.msra.mxu0 0.0
      %1008 = vmatprep.subr.mxu0 0.0
      %1009 = vmatpush1.msra.mxu0 %v976
      %1010 = vmatprep.subr.mxu0 0.0
      %1011 = vmatpush2.msra.mxu0 0.0
      %1012 = vmatprep.subr.mxu0 0.0
      %1013 = vmatpush2.msra.mxu0 0.0
      %1014 = vmatprep.subr.mxu0 0.0
      %1015 = vmatpush2.msra.mxu0 0.0
      %1016 = vmatprep.subr.mxu0 0.0
      %1017 = vmatpush2.msra.mxu0 0.0
      %1018 = vmatprep.subr.mxu0 0.0
      %1019 = vmatpush2.msra.mxu0 0.0
      %1020 = vmatprep.subr.mxu0 0.0
      %1021 = vmatpush2.msra.mxu0 0.0
      %1022 = vmatprep.subr.mxu0 0.0
      %1023 = vmatpush2.msra.mxu0 0.0
      %1024 = vmatprep.subr.mxu0 0.0
      %1025 = vmatpush2.msra.mxu0 0.0
      %1026 = vmatprep.subr.mxu0 0.0
      %1027 = vmatpush2.msra.mxu0 0.0
      %1028 = vmatprep.subr.mxu0 0.0
      %1029 = vmatpush2.msra.mxu0 0.0
      %1030 = vmatprep.subr.mxu0 0.0
      %1031 = vmatpush2.msra.mxu0 0.0
      %1032 = vmatprep.subr.mxu0 0.0
      %1033 = vmatpush2.msra.mxu0 0.0
      %1034 = vmatprep.subr.mxu0 0.0
      %1035 = vmatpush2.msra.mxu0 0.0
      %1036 = vmatprep.subr.mxu0 0.0
      %1037 = vmatpush2.msra.mxu0 0.0
      %1038 = vmatprep.subr.mxu0 0.0
      %1039 = vmatpush2.msra.mxu0 0.0
      %1040 = vmatprep.subr.mxu0 0.0
      %1041 = vmatpush2.msra.mxu0 0.0
      %1042 = vmatprep.mubr.f32.mxu0 0.0
      %1043 = vmatmul.mubr.f32.gmra.mxu0 %v531
      %v1044 = vpop.f32.mrf.mxu0
      %v1045 = vadd.f32 0.0, %v1044
      %v1046 = vpop.f32.mrf.mxu0
      %1047 = vmatprep.mubr.f32.mxu0 0.0
      %1048 = vmatmul.mubr.f32.gmra.mxu0 %v534
      %v1049 = vpop.f32.mrf.mxu0
      %v1050 = vadd.f32 0.0, %v1049
      %v1051 = vpop.f32.mrf.mxu0
      %1052 = vmatprep.mubr.f32.mxu0 0.0
      %1053 = vmatmul.mubr.f32.gmra.mxu0 %v537
      %v1054 = vpop.f32.mrf.mxu0
      %v1055 = vadd.f32 0.0, %v1054
      %v1056 = vpop.f32.mrf.mxu0
      %1057 = vmatprep.mubr.f32.mxu0 0.0
      %1058 = vmatmul.mubr.f32.gmra.mxu0 %v540
      %v1059 = vpop.f32.mrf.mxu0
      %v1060 = vadd.f32 0.0, %v1059
      %v1061 = vpop.f32.mrf.mxu0
      %1062 = vmatprep.mubr.f32.mxu0 0.0
      %1063 = vmatmul.mubr.f32.gmra.mxu0 %v543
      %v1064 = vpop.f32.mrf.mxu0
      %v1065 = vadd.f32 0.0, %v1064
      %v1066 = vpop.f32.mrf.mxu0
      %1067 = vmatprep.mubr.f32.mxu0 0.0
      %1068 = vmatmul.mubr.f32.gmra.mxu0 %v546
      %v1069 = vpop.f32.mrf.mxu0
      %v1070 = vadd.f32 0.0, %v1069
      %v1071 = vpop.f32.mrf.mxu0
      %1072 = vmatprep.mubr.f32.mxu0 0.0
      %1073 = vmatmul.mubr.f32.gmra.mxu0 %v549
      %v1074 = vpop.f32.mrf.mxu0
      %v1075 = vadd.f32 0.0, %v1074
      %v1076 = vpop.f32.mrf.mxu0
      %1077 = vmatprep.mubr.f32.mxu0 0.0
      %1078 = vmatmul.mubr.f32.gmra.mxu0 %v552
      %v1079 = vpop.f32.mrf.mxu0
      %v1080 = vadd.f32 0.0, %v1079
      %v1081 = vpop.f32.mrf.mxu0
      %1082 = vmatprep.mubr.f32.mxu0 0.0
      %1083 = vmatmul.mubr.f32.gmra.mxu0 %v555
      %v1084 = vpop.f32.mrf.mxu0
      %v1085 = vadd.f32 0.0, %v1084
      %v1086 = vpop.f32.mrf.mxu0
      %1087 = vmatprep.mubr.f32.mxu0 0.0
      %1088 = vmatmul.mubr.f32.gmra.mxu0 %v558
      %v1089 = vpop.f32.mrf.mxu0
      %v1090 = vadd.f32 0.0, %v1089
      %v1091 = vpop.f32.mrf.mxu0
      %1092 = vmatprep.mubr.f32.mxu0 0.0
      %1093 = vmatmul.mubr.f32.gmra.mxu0 %v561
      %v1094 = vpop.f32.mrf.mxu0
      %v1095 = vadd.f32 0.0, %v1094
      %v1096 = vpop.f32.mrf.mxu0
      %1097 = vmatprep.mubr.f32.mxu0 0.0
      %1098 = vmatmul.mubr.f32.gmra.mxu0 %v564
      %v1099 = vpop.f32.mrf.mxu0
      %v1100 = vadd.f32 0.0, %v1099
      %v1101 = vpop.f32.mrf.mxu0
      %1102 = vmatprep.mubr.f32.mxu0 0.0
      %1103 = vmatmul.mubr.f32.gmra.mxu0 %v766
      %v1104 = vpop.f32.mrf.mxu0
      %v1105 = vadd.f32 0.0, %v1104
      %v1106 = vpop.f32.mrf.mxu0
      %1107 = vmatprep.mubr.f32.mxu0 0.0
      %1108 = vmatmul.mubr.f32.gmra.mxu0 %v769
      %v1109 = vpop.f32.mrf.mxu0
      %v1110 = vadd.f32 0.0, %v1109
      %v1111 = vpop.f32.mrf.mxu0
      %1112 = vmatprep.mubr.f32.mxu0 0.0
      %1113 = vmatmul.mubr.f32.gmra.mxu0 %v970
      %v1114 = vpop.f32.mrf.mxu0
      %v1115 = vadd.f32 0.0, %v1114
      %v1116 = vpop.f32.mrf.mxu0
      %1117 = vmatprep.mubr.f32.mxu0 0.0
      %1118 = vmatmul.mubr.f32.gmra.mxu0 %v973
      %v1119 = vpop.f32.mrf.mxu0
      %v1120 = vadd.f32 0.0, %v1119
      %v1121 = vpop.f32.mrf.mxu0
      %1122 = vdwg.mxu0
      %v1123 = vadd.f32 %v951, %v1045
      %v1124 = vadd.f32 %v952, %v1050
      %v1125 = vadd.f32 %v953, %v1055
      %v1126 = vadd.f32 %v954, %v1060
      %v1127 = vadd.f32 %v955, %v1065
      %v1128 = vadd.f32 %v956, %v1070
      %v1129 = vadd.f32 %v957, %v1075
      %v1130 = vadd.f32 %v958, %v1080
      %v1131 = vadd.f32 %v959, %v1085
      %v1132 = vadd.f32 %v960, %v1090
      %v1133 = vadd.f32 %v961, %v1095
      %v1134 = vadd.f32 %v962, %v1100
      %v1135 = vadd.f32 %v963, %v1105
      %v1136 = vadd.f32 %v964, %v1110
      %v1137 = vadd.f32 %v965, %v1115
      %v1138 = vadd.f32 %v966, %v1120
      %1139 = vst.msk [vmem:[#allocation3] sm:$0xff] %vm454, %v1123
      %1140 = vst.msk [vmem:[#allocation3 + $0x8] sm:$0xff] %vm454, %v1124
      %1141 = vst.msk [vmem:[#allocation3 + $0x10] sm:$0xff] %vm454, %v1125
      %1142 = vst.msk [vmem:[#allocation3 + $0x18] sm:$0xff] %vm454, %v1126
      %1143 = vst.msk [vmem:[#allocation3 + $0x20] sm:$0xff] %vm454, %v1127
      %1144 = vst.msk [vmem:[#allocation3 + $0x28] sm:$0xff] %vm454, %v1128
      %1145 = vst.msk [vmem:[#allocation3 + $0x30] sm:$0xff] %vm454, %v1129
      %1146 = vst.msk [vmem:[#allocation3 + $0x38] sm:$0xff] %vm454, %v1130
      %1147 = vst.msk [vmem:[#allocation3 + $0x40] sm:$0xff] %vm454, %v1131
      %1148 = vst.msk [vmem:[#allocation3 + $0x48] sm:$0xff] %vm454, %v1132
      %1149 = vst.msk [vmem:[#allocation3 + $0x50] sm:$0xff] %vm454, %v1133
      %1150 = vst.msk [vmem:[#allocation3 + $0x58] sm:$0xff] %vm454, %v1134
      %1151 = vst.msk [vmem:[#allocation3 + $0x60] sm:$0xff] %vm454, %v1135
      %1152 = vst.msk [vmem:[#allocation3 + $0x68] sm:$0xff] %vm454, %v1136
      %1153 = vst.msk [vmem:[#allocation3 + $0x70] sm:$0xff] %vm454, %v1137
      %1154 = vst.msk [vmem:[#allocation3 + $0x78] sm:$0xff] %vm454, %v1138
      %v1155 = vld [vmem:[#allocation3] sm:$0xff]
      %v1156 = vld [vmem:[#allocation3 + $0x8] sm:$0xff]
      %v1157 = vld [vmem:[#allocation3 + $0x10] sm:$0xff]
      %v1158 = vld [vmem:[#allocation3 + $0x18] sm:$0xff]
      %v1159 = vld [vmem:[#allocation3 + $0x20] sm:$0xff]
      %v1160 = vld [vmem:[#allocation3 + $0x28] sm:$0xff]
      %v1161 = vld [vmem:[#allocation3 + $0x30] sm:$0xff]
      %v1162 = vld [vmem:[#allocation3 + $0x38] sm:$0xff]
      %v1163 = vld [vmem:[#allocation3 + $0x40] sm:$0xff]
      %v1164 = vld [vmem:[#allocation3 + $0x48] sm:$0xff]
      %v1165 = vld [vmem:[#allocation3 + $0x50] sm:$0xff]
      %v1166 = vld [vmem:[#allocation3 + $0x58] sm:$0xff]
      %v1167 = vld [vmem:[#allocation3 + $0x60] sm:$0xff]
      %v1168 = vld [vmem:[#allocation3 + $0x68] sm:$0xff]
      %v1169 = vld [vmem:[#allocation3 + $0x70] sm:$0xff]
      %v1170 = vld [vmem:[#allocation3 + $0x78] sm:$0xff]
      %s1171 = scalar_lea.vmem %s3, 4
      %v1172 = vld [vmem:[%s1171] sm:$0xf]
      %vm1181 = vcmask 1046528
      %v1182 = vrot.slane %v471, 1
      %v1183 = vrot.slane %v472, 1
      %v1184 = vsel %vm1181, %v1182, %v1183
      %v1185 = vrot.slane %v473, 1
      %v1186 = vsel %vm1181, %v1183, %v1185
      %v1187 = vrot.slane %v474, 1
      %v1188 = vrot.slane %v475, 1
      %v1189 = vsel %vm1181, %v1187, %v1188
      %v1190 = vrot.slane %v476, 1
      %v1191 = vsel %vm1181, %v1188, %v1190
      %v1192 = vrot.slane %v477, 1
      %v1193 = vrot.slane %v478, 1
      %v1194 = vsel %vm1181, %v1192, %v1193
      %v1195 = vrot.slane %v479, 1
      %v1196 = vsel %vm1181, %v1193, %v1195
      %v1197 = vrot.slane %v480, 1
      %v1198 = vrot.slane %v481, 1
      %v1199 = vsel %vm1181, %v1197, %v1198
      %v1200 = vrot.slane %v482, 1
      %v1201 = vsel %vm1181, %v1198, %v1200
      %v1202 = vrot.slane %v483, 1
      %v1203 = vrot.slane %v484, 1
      %v1204 = vsel %vm1181, %v1202, %v1203
      %v1205 = vrot.slane %v485, 1
      %v1206 = vsel %vm1181, %v1203, %v1205
      %v1207 = vrot.slane %v486, 1
      %v1208 = vrot.slane %v487, 1
      %v1209 = vsel %vm1181, %v1207, %v1208
      %v1210 = vrot.slane %v488, 1
      %v1211 = vsel %vm1181, %v1208, %v1210
      %v1212 = vrot.slane %v489, 1
      %v1213 = vrot.slane %v490, 1
      %v1214 = vsel %vm1181, %v1212, %v1213
      %v1215 = vrot.slane %v491, 1
      %v1216 = vsel %vm1181, %v1213, %v1215
      %v1217 = vrot.slane %v492, 1
      %v1218 = vrot.slane %v493, 1
      %v1219 = vsel %vm1181, %v1217, %v1218
      %v1220 = vrot.slane %v494, 1
      %v1221 = vsel %vm1181, %v1218, %v1220
      %v1222 = vsel %vm414, %v1184, 0
      %v1224 = vsel %vm414, %v1186, 0
      %v1226 = vsel %vm414, %v1189, 0
      %v1228 = vsel %vm414, %v1191, 0
      %v1230 = vsel %vm414, %v1194, 0
      %v1232 = vsel %vm414, %v1196, 0
      %v1234 = vsel %vm414, %v1199, 0
      %v1236 = vsel %vm414, %v1201, 0
      %v1238 = vsel %vm414, %v1204, 0
      %v1240 = vsel %vm414, %v1206, 0
      %v1242 = vsel %vm414, %v1209, 0
      %v1244 = vsel %vm414, %v1211, 0
      %v1246 = vsel %vm414, %v1214, 0
      %v1248 = vsel %vm414, %v1216, 0
      %v1250 = vsel %vm414, %v1219, 0
      %v1252 = vsel %vm414, %v1221, 0
      %v1255 = vsel %vm566, %v1172, 0
      %1257 = vmatprep.subr.mxu0 0.0
      %1258 = vmatpush1.msra.mxu0 0.0
      %1259 = vmatprep.subr.mxu0 0.0
      %1260 = vmatpush1.msra.mxu0 0.0
      %1261 = vmatprep.subr.mxu0 0.0
      %1262 = vmatpush1.msra.mxu0 0.0
      %1263 = vmatprep.subr.mxu0 0.0
      %1264 = vmatpush1.msra.mxu0 0.0
      %1265 = vmatprep.subr.mxu0 0.0
      %1266 = vmatpush1.msra.mxu0 0.0
      %1267 = vmatprep.subr.mxu0 0.0
      %1268 = vmatpush1.msra.mxu0 0.0
      %1269 = vmatprep.subr.mxu0 0.0
      %1270 = vmatpush1.msra.mxu0 0.0
      %1271 = vmatprep.subr.mxu0 0.0
      %1272 = vmatpush1.msra.mxu0 0.0
      %1273 = vmatprep.subr.mxu0 0.0
      %1274 = vmatpush1.msra.mxu0 0.0
      %1275 = vmatprep.subr.mxu0 0.0
      %1276 = vmatpush1.msra.mxu0 0.0
      %1277 = vmatprep.subr.mxu0 0.0
      %1278 = vmatpush1.msra.mxu0 0.0
      %1279 = vmatprep.subr.mxu0 0.0
      %1280 = vmatpush1.msra.mxu0 0.0
      %1281 = vmatprep.subr.mxu0 0.0
      %1282 = vmatpush1.msra.mxu0 0.0
      %1283 = vmatprep.subr.mxu0 0.0
      %1284 = vmatpush1.msra.mxu0 0.0
      %1285 = vmatprep.subr.mxu0 0.0
      %1286 = vmatpush1.msra.mxu0 0.0
      %1287 = vmatprep.subr.mxu0 0.0
      %1288 = vmatpush1.msra.mxu0 %v1255
      %1289 = vmatprep.subr.mxu0 0.0
      %1290 = vmatpush2.msra.mxu0 0.0
      %1291 = vmatprep.subr.mxu0 0.0
      %1292 = vmatpush2.msra.mxu0 0.0
      %1293 = vmatprep.subr.mxu0 0.0
      %1294 = vmatpush2.msra.mxu0 0.0
      %1295 = vmatprep.subr.mxu0 0.0
      %1296 = vmatpush2.msra.mxu0 0.0
      %1297 = vmatprep.subr.mxu0 0.0
      %1298 = vmatpush2.msra.mxu0 0.0
      %1299 = vmatprep.subr.mxu0 0.0
      %1300 = vmatpush2.msra.mxu0 0.0
      %1301 = vmatprep.subr.mxu0 0.0
      %1302 = vmatpush2.msra.mxu0 0.0
      %1303 = vmatprep.subr.mxu0 0.0
      %1304 = vmatpush2.msra.mxu0 0.0
      %1305 = vmatprep.subr.mxu0 0.0
      %1306 = vmatpush2.msra.mxu0 0.0
      %1307 = vmatprep.subr.mxu0 0.0
      %1308 = vmatpush2.msra.mxu0 0.0
      %1309 = vmatprep.subr.mxu0 0.0
      %1310 = vmatpush2.msra.mxu0 0.0
      %1311 = vmatprep.subr.mxu0 0.0
      %1312 = vmatpush2.msra.mxu0 0.0
      %1313 = vmatprep.subr.mxu0 0.0
      %1314 = vmatpush2.msra.mxu0 0.0
      %1315 = vmatprep.subr.mxu0 0.0
      %1316 = vmatpush2.msra.mxu0 0.0
      %1317 = vmatprep.subr.mxu0 0.0
      %1318 = vmatpush2.msra.mxu0 0.0
      %1319 = vmatprep.subr.mxu0 0.0
      %1320 = vmatpush2.msra.mxu0 0.0
      %1321 = vmatprep.mubr.f32.mxu0 0.0
      %1322 = vmatmul.mubr.f32.gmra.mxu0 %v1222
      %v1323 = vpop.f32.mrf.mxu0
      %v1324 = vadd.f32 0.0, %v1323
      %v1325 = vpop.f32.mrf.mxu0
      %1326 = vmatprep.mubr.f32.mxu0 0.0
      %1327 = vmatmul.mubr.f32.gmra.mxu0 %v1224
      %v1328 = vpop.f32.mrf.mxu0
      %v1329 = vadd.f32 0.0, %v1328
      %v1330 = vpop.f32.mrf.mxu0
      %1331 = vmatprep.mubr.f32.mxu0 0.0
      %1332 = vmatmul.mubr.f32.gmra.mxu0 %v1226
      %v1333 = vpop.f32.mrf.mxu0
      %v1334 = vadd.f32 0.0, %v1333
      %v1335 = vpop.f32.mrf.mxu0
      %1336 = vmatprep.mubr.f32.mxu0 0.0
      %1337 = vmatmul.mubr.f32.gmra.mxu0 %v1228
      %v1338 = vpop.f32.mrf.mxu0
      %v1339 = vadd.f32 0.0, %v1338
      %v1340 = vpop.f32.mrf.mxu0
      %1341 = vmatprep.mubr.f32.mxu0 0.0
      %1342 = vmatmul.mubr.f32.gmra.mxu0 %v1230
      %v1343 = vpop.f32.mrf.mxu0
      %v1344 = vadd.f32 0.0, %v1343
      %v1345 = vpop.f32.mrf.mxu0
      %1346 = vmatprep.mubr.f32.mxu0 0.0
      %1347 = vmatmul.mubr.f32.gmra.mxu0 %v1232
      %v1348 = vpop.f32.mrf.mxu0
      %v1349 = vadd.f32 0.0, %v1348
      %v1350 = vpop.f32.mrf.mxu0
      %1351 = vmatprep.mubr.f32.mxu0 0.0
      %1352 = vmatmul.mubr.f32.gmra.mxu0 %v1234
      %v1353 = vpop.f32.mrf.mxu0
      %v1354 = vadd.f32 0.0, %v1353
      %v1355 = vpop.f32.mrf.mxu0
      %1356 = vmatprep.mubr.f32.mxu0 0.0
      %1357 = vmatmul.mubr.f32.gmra.mxu0 %v1236
      %v1358 = vpop.f32.mrf.mxu0
      %v1359 = vadd.f32 0.0, %v1358
      %v1360 = vpop.f32.mrf.mxu0
      %1361 = vmatprep.mubr.f32.mxu0 0.0
      %1362 = vmatmul.mubr.f32.gmra.mxu0 %v1238
      %v1363 = vpop.f32.mrf.mxu0
      %v1364 = vadd.f32 0.0, %v1363
      %v1365 = vpop.f32.mrf.mxu0
      %1366 = vmatprep.mubr.f32.mxu0 0.0
      %1367 = vmatmul.mubr.f32.gmra.mxu0 %v1240
      %v1368 = vpop.f32.mrf.mxu0
      %v1369 = vadd.f32 0.0, %v1368
      %v1370 = vpop.f32.mrf.mxu0
      %1371 = vmatprep.mubr.f32.mxu0 0.0
      %1372 = vmatmul.mubr.f32.gmra.mxu0 %v1242
      %v1373 = vpop.f32.mrf.mxu0
      %v1374 = vadd.f32 0.0, %v1373
      %v1375 = vpop.f32.mrf.mxu0
      %1376 = vmatprep.mubr.f32.mxu0 0.0
      %1377 = vmatmul.mubr.f32.gmra.mxu0 %v1244
      %v1378 = vpop.f32.mrf.mxu0
      %v1379 = vadd.f32 0.0, %v1378
      %v1380 = vpop.f32.mrf.mxu0
      %1381 = vmatprep.mubr.f32.mxu0 0.0
      %1382 = vmatmul.mubr.f32.gmra.mxu0 %v1246
      %v1383 = vpop.f32.mrf.mxu0
      %v1384 = vadd.f32 0.0, %v1383
      %v1385 = vpop.f32.mrf.mxu0
      %1386 = vmatprep.mubr.f32.mxu0 0.0
      %1387 = vmatmul.mubr.f32.gmra.mxu0 %v1248
      %v1388 = vpop.f32.mrf.mxu0
      %v1389 = vadd.f32 0.0, %v1388
      %v1390 = vpop.f32.mrf.mxu0
      %1391 = vmatprep.mubr.f32.mxu0 0.0
      %1392 = vmatmul.mubr.f32.gmra.mxu0 %v1250
      %v1393 = vpop.f32.mrf.mxu0
      %v1394 = vadd.f32 0.0, %v1393
      %v1395 = vpop.f32.mrf.mxu0
      %1396 = vmatprep.mubr.f32.mxu0 0.0
      %1397 = vmatmul.mubr.f32.gmra.mxu0 %v1252
      %v1398 = vpop.f32.mrf.mxu0
      %v1399 = vadd.f32 0.0, %v1398
      %v1400 = vpop.f32.mrf.mxu0
      %1401 = vdwg.mxu0
      %v1402 = vadd.f32 %v1155, %v1324
      %v1403 = vadd.f32 %v1156, %v1329
      %v1404 = vadd.f32 %v1157, %v1334
      %v1405 = vadd.f32 %v1158, %v1339
      %v1406 = vadd.f32 %v1159, %v1344
      %v1407 = vadd.f32 %v1160, %v1349
      %v1408 = vadd.f32 %v1161, %v1354
      %v1409 = vadd.f32 %v1162, %v1359
      %v1410 = vadd.f32 %v1163, %v1364
      %v1411 = vadd.f32 %v1164, %v1369
      %v1412 = vadd.f32 %v1165, %v1374
      %v1413 = vadd.f32 %v1166, %v1379
      %v1414 = vadd.f32 %v1167, %v1384
      %v1415 = vadd.f32 %v1168, %v1389
      %v1416 = vadd.f32 %v1169, %v1394
      %v1417 = vadd.f32 %v1170, %v1399
      %1418 = vst.msk [vmem:[#allocation3] sm:$0xff] %vm454, %v1402
      %1419 = vst.msk [vmem:[#allocation3 + $0x8] sm:$0xff] %vm454, %v1403
      %1420 = vst.msk [vmem:[#allocation3 + $0x10] sm:$0xff] %vm454, %v1404
      %1421 = vst.msk [vmem:[#allocation3 + $0x18] sm:$0xff] %vm454, %v1405
      %1422 = vst.msk [vmem:[#allocation3 + $0x20] sm:$0xff] %vm454, %v1406
      %1423 = vst.msk [vmem:[#allocation3 + $0x28] sm:$0xff] %vm454, %v1407
      %1424 = vst.msk [vmem:[#allocation3 + $0x30] sm:$0xff] %vm454, %v1408
      %1425 = vst.msk [vmem:[#allocation3 + $0x38] sm:$0xff] %vm454, %v1409
      %1426 = vst.msk [vmem:[#allocation3 + $0x40] sm:$0xff] %vm454, %v1410
      %1427 = vst.msk [vmem:[#allocation3 + $0x48] sm:$0xff] %vm454, %v1411
      %1428 = vst.msk [vmem:[#allocation3 + $0x50] sm:$0xff] %vm454, %v1412
      %1429 = vst.msk [vmem:[#allocation3 + $0x58] sm:$0xff] %vm454, %v1413
      %1430 = vst.msk [vmem:[#allocation3 + $0x60] sm:$0xff] %vm454, %v1414
      %1431 = vst.msk [vmem:[#allocation3 + $0x68] sm:$0xff] %vm454, %v1415
      %1432 = vst.msk [vmem:[#allocation3 + $0x70] sm:$0xff] %vm454, %v1416
      %1433 = vst.msk [vmem:[#allocation3 + $0x78] sm:$0xff] %vm454, %v1417
      %v1434 = vld [vmem:[#allocation3] sm:$0xff]
      %v1435 = vld [vmem:[#allocation3 + $0x8] sm:$0xff]
      %v1436 = vld [vmem:[#allocation3 + $0x10] sm:$0xff]
      %v1437 = vld [vmem:[#allocation3 + $0x18] sm:$0xff]
      %v1438 = vld [vmem:[#allocation3 + $0x20] sm:$0xff]
      %v1439 = vld [vmem:[#allocation3 + $0x28] sm:$0xff]
      %v1440 = vld [vmem:[#allocation3 + $0x30] sm:$0xff]
      %v1441 = vld [vmem:[#allocation3 + $0x38] sm:$0xff]
      %v1442 = vld [vmem:[#allocation3 + $0x40] sm:$0xff]
      %v1443 = vld [vmem:[#allocation3 + $0x48] sm:$0xff]
      %v1444 = vld [vmem:[#allocation3 + $0x50] sm:$0xff]
      %v1445 = vld [vmem:[#allocation3 + $0x58] sm:$0xff]
      %v1446 = vld [vmem:[#allocation3 + $0x60] sm:$0xff]
      %v1447 = vld [vmem:[#allocation3 + $0x68] sm:$0xff]
      %v1448 = vld [vmem:[#allocation3 + $0x70] sm:$0xff]
      %v1449 = vld [vmem:[#allocation3 + $0x78] sm:$0xff]
      %s1450 = scalar_lea.vmem %s3, 16
      %v1451 = vld [vmem:[%s1450] sm:$0xf]
      %v1453 = vrot.slane %v495, 1
      %v1454 = vrot.slane %v496, 1
      %v1455 = vsel %vm1181, %v1453, %v1454
      %v1456 = vrot.slane %v497, 1
      %v1457 = vsel %vm1181, %v1454, %v1456
      %v1458 = vsel %vm414, %v1455, 0
      %v1460 = vsel %vm414, %v1457, 0
      %v1463 = vsel %vm566, %v1451, 0
      %1465 = vmatprep.subr.mxu0 0.0
      %1466 = vmatpush1.msra.mxu0 0.0
      %1467 = vmatprep.subr.mxu0 0.0
      %1468 = vmatpush1.msra.mxu0 0.0
      %1469 = vmatprep.subr.mxu0 0.0
      %1470 = vmatpush1.msra.mxu0 0.0
      %1471 = vmatprep.subr.mxu0 0.0
      %1472 = vmatpush1.msra.mxu0 0.0
      %1473 = vmatprep.subr.mxu0 0.0
      %1474 = vmatpush1.msra.mxu0 0.0
      %1475 = vmatprep.subr.mxu0 0.0
      %1476 = vmatpush1.msra.mxu0 0.0
      %1477 = vmatprep.subr.mxu0 0.0
      %1478 = vmatpush1.msra.mxu0 0.0
      %1479 = vmatprep.subr.mxu0 0.0
      %1480 = vmatpush1.msra.mxu0 0.0
      %1481 = vmatprep.subr.mxu0 0.0
      %1482 = vmatpush1.msra.mxu0 0.0
      %1483 = vmatprep.subr.mxu0 0.0
      %1484 = vmatpush1.msra.mxu0 0.0
      %1485 = vmatprep.subr.mxu0 0.0
      %1486 = vmatpush1.msra.mxu0 0.0
      %1487 = vmatprep.subr.mxu0 0.0
      %1488 = vmatpush1.msra.mxu0 0.0
      %1489 = vmatprep.subr.mxu0 0.0
      %1490 = vmatpush1.msra.mxu0 0.0
      %1491 = vmatprep.subr.mxu0 0.0
      %1492 = vmatpush1.msra.mxu0 0.0
      %1493 = vmatprep.subr.mxu0 0.0
      %1494 = vmatpush1.msra.mxu0 0.0
      %1495 = vmatprep.subr.mxu0 0.0
      %1496 = vmatpush1.msra.mxu0 %v1463
      %1497 = vmatprep.subr.mxu0 0.0
      %1498 = vmatpush2.msra.mxu0 0.0
      %1499 = vmatprep.subr.mxu0 0.0
      %1500 = vmatpush2.msra.mxu0 0.0
      %1501 = vmatprep.subr.mxu0 0.0
      %1502 = vmatpush2.msra.mxu0 0.0
      %1503 = vmatprep.subr.mxu0 0.0
      %1504 = vmatpush2.msra.mxu0 0.0
      %1505 = vmatprep.subr.mxu0 0.0
      %1506 = vmatpush2.msra.mxu0 0.0
      %1507 = vmatprep.subr.mxu0 0.0
      %1508 = vmatpush2.msra.mxu0 0.0
      %1509 = vmatprep.subr.mxu0 0.0
      %1510 = vmatpush2.msra.mxu0 0.0
      %1511 = vmatprep.subr.mxu0 0.0
      %1512 = vmatpush2.msra.mxu0 0.0
      %1513 = vmatprep.subr.mxu0 0.0
      %1514 = vmatpush2.msra.mxu0 0.0
      %1515 = vmatprep.subr.mxu0 0.0
      %1516 = vmatpush2.msra.mxu0 0.0
      %1517 = vmatprep.subr.mxu0 0.0
      %1518 = vmatpush2.msra.mxu0 0.0
      %1519 = vmatprep.subr.mxu0 0.0
      %1520 = vmatpush2.msra.mxu0 0.0
      %1521 = vmatprep.subr.mxu0 0.0
      %1522 = vmatpush2.msra.mxu0 0.0
      %1523 = vmatprep.subr.mxu0 0.0
      %1524 = vmatpush2.msra.mxu0 0.0
      %1525 = vmatprep.subr.mxu0 0.0
      %1526 = vmatpush2.msra.mxu0 0.0
      %1527 = vmatprep.subr.mxu0 0.0
      %1528 = vmatpush2.msra.mxu0 0.0
      %1529 = vmatprep.mubr.f32.mxu0 0.0
      %1530 = vmatmul.mubr.f32.gmra.mxu0 %v1226
      %v1531 = vpop.f32.mrf.mxu0
      %v1532 = vadd.f32 0.0, %v1531
      %v1533 = vpop.f32.mrf.mxu0
      %1534 = vmatprep.mubr.f32.mxu0 0.0
      %1535 = vmatmul.mubr.f32.gmra.mxu0 %v1228
      %v1536 = vpop.f32.mrf.mxu0
      %v1537 = vadd.f32 0.0, %v1536
      %v1538 = vpop.f32.mrf.mxu0
      %1539 = vmatprep.mubr.f32.mxu0 0.0
      %1540 = vmatmul.mubr.f32.gmra.mxu0 %v1230
      %v1541 = vpop.f32.mrf.mxu0
      %v1542 = vadd.f32 0.0, %v1541
      %v1543 = vpop.f32.mrf.mxu0
      %1544 = vmatprep.mubr.f32.mxu0 0.0
      %1545 = vmatmul.mubr.f32.gmra.mxu0 %v1232
      %v1546 = vpop.f32.mrf.mxu0
      %v1547 = vadd.f32 0.0, %v1546
      %v1548 = vpop.f32.mrf.mxu0
      %1549 = vmatprep.mubr.f32.mxu0 0.0
      %1550 = vmatmul.mubr.f32.gmra.mxu0 %v1234
      %v1551 = vpop.f32.mrf.mxu0
      %v1552 = vadd.f32 0.0, %v1551
      %v1553 = vpop.f32.mrf.mxu0
      %1554 = vmatprep.mubr.f32.mxu0 0.0
      %1555 = vmatmul.mubr.f32.gmra.mxu0 %v1236
      %v1556 = vpop.f32.mrf.mxu0
      %v1557 = vadd.f32 0.0, %v1556
      %v1558 = vpop.f32.mrf.mxu0
      %1559 = vmatprep.mubr.f32.mxu0 0.0
      %1560 = vmatmul.mubr.f32.gmra.mxu0 %v1238
      %v1561 = vpop.f32.mrf.mxu0
      %v1562 = vadd.f32 0.0, %v1561
      %v1563 = vpop.f32.mrf.mxu0
      %1564 = vmatprep.mubr.f32.mxu0 0.0
      %1565 = vmatmul.mubr.f32.gmra.mxu0 %v1240
      %v1566 = vpop.f32.mrf.mxu0
      %v1567 = vadd.f32 0.0, %v1566
      %v1568 = vpop.f32.mrf.mxu0
      %1569 = vmatprep.mubr.f32.mxu0 0.0
      %1570 = vmatmul.mubr.f32.gmra.mxu0 %v1242
      %v1571 = vpop.f32.mrf.mxu0
      %v1572 = vadd.f32 0.0, %v1571
      %v1573 = vpop.f32.mrf.mxu0
      %1574 = vmatprep.mubr.f32.mxu0 0.0
      %1575 = vmatmul.mubr.f32.gmra.mxu0 %v1244
      %v1576 = vpop.f32.mrf.mxu0
      %v1577 = vadd.f32 0.0, %v1576
      %v1578 = vpop.f32.mrf.mxu0
      %1579 = vmatprep.mubr.f32.mxu0 0.0
      %1580 = vmatmul.mubr.f32.gmra.mxu0 %v1246
      %v1581 = vpop.f32.mrf.mxu0
      %v1582 = vadd.f32 0.0, %v1581
      %v1583 = vpop.f32.mrf.mxu0
      %1584 = vmatprep.mubr.f32.mxu0 0.0
      %1585 = vmatmul.mubr.f32.gmra.mxu0 %v1248
      %v1586 = vpop.f32.mrf.mxu0
      %v1587 = vadd.f32 0.0, %v1586
      %v1588 = vpop.f32.mrf.mxu0
      %1589 = vmatprep.mubr.f32.mxu0 0.0
      %1590 = vmatmul.mubr.f32.gmra.mxu0 %v1250
      %v1591 = vpop.f32.mrf.mxu0
      %v1592 = vadd.f32 0.0, %v1591
      %v1593 = vpop.f32.mrf.mxu0
      %1594 = vmatprep.mubr.f32.mxu0 0.0
      %1595 = vmatmul.mubr.f32.gmra.mxu0 %v1252
      %v1596 = vpop.f32.mrf.mxu0
      %v1597 = vadd.f32 0.0, %v1596
      %v1598 = vpop.f32.mrf.mxu0
      %1599 = vmatprep.mubr.f32.mxu0 0.0
      %1600 = vmatmul.mubr.f32.gmra.mxu0 %v1458
      %v1601 = vpop.f32.mrf.mxu0
      %v1602 = vadd.f32 0.0, %v1601
      %v1603 = vpop.f32.mrf.mxu0
      %1604 = vmatprep.mubr.f32.mxu0 0.0
      %1605 = vmatmul.mubr.f32.gmra.mxu0 %v1460
      %v1606 = vpop.f32.mrf.mxu0
      %v1607 = vadd.f32 0.0, %v1606
      %v1608 = vpop.f32.mrf.mxu0
      %1609 = vdwg.mxu0
      %v1610 = vadd.f32 %v1434, %v1532
      %v1611 = vadd.f32 %v1435, %v1537
      %v1612 = vadd.f32 %v1436, %v1542
      %v1613 = vadd.f32 %v1437, %v1547
      %v1614 = vadd.f32 %v1438, %v1552
      %v1615 = vadd.f32 %v1439, %v1557
      %v1616 = vadd.f32 %v1440, %v1562
      %v1617 = vadd.f32 %v1441, %v1567
      %v1618 = vadd.f32 %v1442, %v1572
      %v1619 = vadd.f32 %v1443, %v1577
      %v1620 = vadd.f32 %v1444, %v1582
      %v1621 = vadd.f32 %v1445, %v1587
      %v1622 = vadd.f32 %v1446, %v1592
      %v1623 = vadd.f32 %v1447, %v1597
      %v1624 = vadd.f32 %v1448, %v1602
      %v1625 = vadd.f32 %v1449, %v1607
      %1626 = vst.msk [vmem:[#allocation3] sm:$0xff] %vm454, %v1610
      %1627 = vst.msk [vmem:[#allocation3 + $0x8] sm:$0xff] %vm454, %v1611
      %1628 = vst.msk [vmem:[#allocation3 + $0x10] sm:$0xff] %vm454, %v1612
      %1629 = vst.msk [vmem:[#allocation3 + $0x18] sm:$0xff] %vm454, %v1613
      %1630 = vst.msk [vmem:[#allocation3 + $0x20] sm:$0xff] %vm454, %v1614
      %1631 = vst.msk [vmem:[#allocation3 + $0x28] sm:$0xff] %vm454, %v1615
      %1632 = vst.msk [vmem:[#allocation3 + $0x30] sm:$0xff] %vm454, %v1616
      %1633 = vst.msk [vmem:[#allocation3 + $0x38] sm:$0xff] %vm454, %v1617
      %1634 = vst.msk [vmem:[#allocation3 + $0x40] sm:$0xff] %vm454, %v1618
      %1635 = vst.msk [vmem:[#allocation3 + $0x48] sm:$0xff] %vm454, %v1619
      %1636 = vst.msk [vmem:[#allocation3 + $0x50] sm:$0xff] %vm454, %v1620
      %1637 = vst.msk [vmem:[#allocation3 + $0x58] sm:$0xff] %vm454, %v1621
      %1638 = vst.msk [vmem:[#allocation3 + $0x60] sm:$0xff] %vm454, %v1622
      %1639 = vst.msk [vmem:[#allocation3 + $0x68] sm:$0xff] %vm454, %v1623
      %1640 = vst.msk [vmem:[#allocation3 + $0x70] sm:$0xff] %vm454, %v1624
      %1641 = vst.msk [vmem:[#allocation3 + $0x78] sm:$0xff] %vm454, %v1625
      %v1642 = vld [vmem:[#allocation3] sm:$0xff]
      %v1643 = vld [vmem:[#allocation3 + $0x8] sm:$0xff]
      %v1644 = vld [vmem:[#allocation3 + $0x10] sm:$0xff]
      %v1645 = vld [vmem:[#allocation3 + $0x18] sm:$0xff]
      %v1646 = vld [vmem:[#allocation3 + $0x20] sm:$0xff]
      %v1647 = vld [vmem:[#allocation3 + $0x28] sm:$0xff]
      %v1648 = vld [vmem:[#allocation3 + $0x30] sm:$0xff]
      %v1649 = vld [vmem:[#allocation3 + $0x38] sm:$0xff]
      %v1650 = vld [vmem:[#allocation3 + $0x40] sm:$0xff]
      %v1651 = vld [vmem:[#allocation3 + $0x48] sm:$0xff]
      %v1652 = vld [vmem:[#allocation3 + $0x50] sm:$0xff]
      %v1653 = vld [vmem:[#allocation3 + $0x58] sm:$0xff]
      %v1654 = vld [vmem:[#allocation3 + $0x60] sm:$0xff]
      %v1655 = vld [vmem:[#allocation3 + $0x68] sm:$0xff]
      %v1656 = vld [vmem:[#allocation3 + $0x70] sm:$0xff]
      %v1657 = vld [vmem:[#allocation3 + $0x78] sm:$0xff]
      %s1658 = scalar_lea.vmem %s3, 28
      %v1659 = vld [vmem:[%s1658] sm:$0xf]
      %v1661 = vrot.slane %v498, 1
      %v1662 = vrot.slane %v499, 1
      %v1663 = vsel %vm1181, %v1661, %v1662
      %v1664 = vrot.slane %v500, 1
      %v1665 = vsel %vm1181, %v1662, %v1664
      %v1666 = vsel %vm414, %v1663, 0
      %v1668 = vsel %vm414, %v1665, 0
      %v1671 = vsel %vm566, %v1659, 0
      %1673 = vmatprep.subr.mxu0 0.0
      %1674 = vmatpush1.msra.mxu0 0.0
      %1675 = vmatprep.subr.mxu0 0.0
      %1676 = vmatpush1.msra.mxu0 0.0
      %1677 = vmatprep.subr.mxu0 0.0
      %1678 = vmatpush1.msra.mxu0 0.0
      %1679 = vmatprep.subr.mxu0 0.0
      %1680 = vmatpush1.msra.mxu0 0.0
      %1681 = vmatprep.subr.mxu0 0.0
      %1682 = vmatpush1.msra.mxu0 0.0
      %1683 = vmatprep.subr.mxu0 0.0
      %1684 = vmatpush1.msra.mxu0 0.0
      %1685 = vmatprep.subr.mxu0 0.0
      %1686 = vmatpush1.msra.mxu0 0.0
      %1687 = vmatprep.subr.mxu0 0.0
      %1688 = vmatpush1.msra.mxu0 0.0
      %1689 = vmatprep.subr.mxu0 0.0
      %1690 = vmatpush1.msra.mxu0 0.0
      %1691 = vmatprep.subr.mxu0 0.0
      %1692 = vmatpush1.msra.mxu0 0.0
      %1693 = vmatprep.subr.mxu0 0.0
      %1694 = vmatpush1.msra.mxu0 0.0
      %1695 = vmatprep.subr.mxu0 0.0
      %1696 = vmatpush1.msra.mxu0 0.0
      %1697 = vmatprep.subr.mxu0 0.0
      %1698 = vmatpush1.msra.mxu0 0.0
      %1699 = vmatprep.subr.mxu0 0.0
      %1700 = vmatpush1.msra.mxu0 0.0
      %1701 = vmatprep.subr.mxu0 0.0
      %1702 = vmatpush1.msra.mxu0 0.0
      %1703 = vmatprep.subr.mxu0 0.0
      %1704 = vmatpush1.msra.mxu0 %v1671
      %1705 = vmatprep.subr.mxu0 0.0
      %1706 = vmatpush2.msra.mxu0 0.0
      %1707 = vmatprep.subr.mxu0 0.0
      %1708 = vmatpush2.msra.mxu0 0.0
      %1709 = vmatprep.subr.mxu0 0.0
      %1710 = vmatpush2.msra.mxu0 0.0
      %1711 = vmatprep.subr.mxu0 0.0
      %1712 = vmatpush2.msra.mxu0 0.0
      %1713 = vmatprep.subr.mxu0 0.0
      %1714 = vmatpush2.msra.mxu0 0.0
      %1715 = vmatprep.subr.mxu0 0.0
      %1716 = vmatpush2.msra.mxu0 0.0
      %1717 = vmatprep.subr.mxu0 0.0
      %1718 = vmatpush2.msra.mxu0 0.0
      %1719 = vmatprep.subr.mxu0 0.0
      %1720 = vmatpush2.msra.mxu0 0.0
      %1721 = vmatprep.subr.mxu0 0.0
      %1722 = vmatpush2.msra.mxu0 0.0
      %1723 = vmatprep.subr.mxu0 0.0
      %1724 = vmatpush2.msra.mxu0 0.0
      %1725 = vmatprep.subr.mxu0 0.0
      %1726 = vmatpush2.msra.mxu0 0.0
      %1727 = vmatprep.subr.mxu0 0.0
      %1728 = vmatpush2.msra.mxu0 0.0
      %1729 = vmatprep.subr.mxu0 0.0
      %1730 = vmatpush2.msra.mxu0 0.0
      %1731 = vmatprep.subr.mxu0 0.0
      %1732 = vmatpush2.msra.mxu0 0.0
      %1733 = vmatprep.subr.mxu0 0.0
      %1734 = vmatpush2.msra.mxu0 0.0
      %1735 = vmatprep.subr.mxu0 0.0
      %1736 = vmatpush2.msra.mxu0 0.0
      %1737 = vmatprep.mubr.f32.mxu0 0.0
      %1738 = vmatmul.mubr.f32.gmra.mxu0 %v1230
      %v1739 = vpop.f32.mrf.mxu0
      %v1740 = vadd.f32 0.0, %v1739
      %v1741 = vpop.f32.mrf.mxu0
      %1742 = vmatprep.mubr.f32.mxu0 0.0
      %1743 = vmatmul.mubr.f32.gmra.mxu0 %v1232
      %v1744 = vpop.f32.mrf.mxu0
      %v1745 = vadd.f32 0.0, %v1744
      %v1746 = vpop.f32.mrf.mxu0
      %1747 = vmatprep.mubr.f32.mxu0 0.0
      %1748 = vmatmul.mubr.f32.gmra.mxu0 %v1234
      %v1749 = vpop.f32.mrf.mxu0
      %v1750 = vadd.f32 0.0, %v1749
      %v1751 = vpop.f32.mrf.mxu0
      %1752 = vmatprep.mubr.f32.mxu0 0.0
      %1753 = vmatmul.mubr.f32.gmra.mxu0 %v1236
      %v1754 = vpop.f32.mrf.mxu0
      %v1755 = vadd.f32 0.0, %v1754
      %v1756 = vpop.f32.mrf.mxu0
      %1757 = vmatprep.mubr.f32.mxu0 0.0
      %1758 = vmatmul.mubr.f32.gmra.mxu0 %v1238
      %v1759 = vpop.f32.mrf.mxu0
      %v1760 = vadd.f32 0.0, %v1759
      %v1761 = vpop.f32.mrf.mxu0
      %1762 = vmatprep.mubr.f32.mxu0 0.0
      %1763 = vmatmul.mubr.f32.gmra.mxu0 %v1240
      %v1764 = vpop.f32.mrf.mxu0
      %v1765 = vadd.f32 0.0, %v1764
      %v1766 = vpop.f32.mrf.mxu0
      %1767 = vmatprep.mubr.f32.mxu0 0.0
      %1768 = vmatmul.mubr.f32.gmra.mxu0 %v1242
      %v1769 = vpop.f32.mrf.mxu0
      %v1770 = vadd.f32 0.0, %v1769
      %v1771 = vpop.f32.mrf.mxu0
      %1772 = vmatprep.mubr.f32.mxu0 0.0
      %1773 = vmatmul.mubr.f32.gmra.mxu0 %v1244
      %v1774 = vpop.f32.mrf.mxu0
      %v1775 = vadd.f32 0.0, %v1774
      %v1776 = vpop.f32.mrf.mxu0
      %1777 = vmatprep.mubr.f32.mxu0 0.0
      %1778 = vmatmul.mubr.f32.gmra.mxu0 %v1246
      %v1779 = vpop.f32.mrf.mxu0
      %v1780 = vadd.f32 0.0, %v1779
      %v1781 = vpop.f32.mrf.mxu0
      %1782 = vmatprep.mubr.f32.mxu0 0.0
      %1783 = vmatmul.mubr.f32.gmra.mxu0 %v1248
      %v1784 = vpop.f32.mrf.mxu0
      %v1785 = vadd.f32 0.0, %v1784
      %v1786 = vpop.f32.mrf.mxu0
      %1787 = vmatprep.mubr.f32.mxu0 0.0
      %1788 = vmatmul.mubr.f32.gmra.mxu0 %v1250
      %v1789 = vpop.f32.mrf.mxu0
      %v1790 = vadd.f32 0.0, %v1789
      %v1791 = vpop.f32.mrf.mxu0
      %1792 = vmatprep.mubr.f32.mxu0 0.0
      %1793 = vmatmul.mubr.f32.gmra.mxu0 %v1252
      %v1794 = vpop.f32.mrf.mxu0
      %v1795 = vadd.f32 0.0, %v1794
      %v1796 = vpop.f32.mrf.mxu0
      %1797 = vmatprep.mubr.f32.mxu0 0.0
      %1798 = vmatmul.mubr.f32.gmra.mxu0 %v1458
      %v1799 = vpop.f32.mrf.mxu0
      %v1800 = vadd.f32 0.0, %v1799
      %v1801 = vpop.f32.mrf.mxu0
      %1802 = vmatprep.mubr.f32.mxu0 0.0
      %1803 = vmatmul.mubr.f32.gmra.mxu0 %v1460
      %v1804 = vpop.f32.mrf.mxu0
      %v1805 = vadd.f32 0.0, %v1804
      %v1806 = vpop.f32.mrf.mxu0
      %1807 = vmatprep.mubr.f32.mxu0 0.0
      %1808 = vmatmul.mubr.f32.gmra.mxu0 %v1666
      %v1809 = vpop.f32.mrf.mxu0
      %v1810 = vadd.f32 0.0, %v1809
      %v1811 = vpop.f32.mrf.mxu0
      %1812 = vmatprep.mubr.f32.mxu0 0.0
      %1813 = vmatmul.mubr.f32.gmra.mxu0 %v1668
      %v1814 = vpop.f32.mrf.mxu0
      %v1815 = vadd.f32 0.0, %v1814
      %v1816 = vpop.f32.mrf.mxu0
      %1817 = vdwg.mxu0
      %v1818 = vadd.f32 %v1642, %v1740
      %v1819 = vadd.f32 %v1643, %v1745
      %v1820 = vadd.f32 %v1644, %v1750
      %v1821 = vadd.f32 %v1645, %v1755
      %v1822 = vadd.f32 %v1646, %v1760
      %v1823 = vadd.f32 %v1647, %v1765
      %v1824 = vadd.f32 %v1648, %v1770
      %v1825 = vadd.f32 %v1649, %v1775
      %v1826 = vadd.f32 %v1650, %v1780
      %v1827 = vadd.f32 %v1651, %v1785
      %v1828 = vadd.f32 %v1652, %v1790
      %v1829 = vadd.f32 %v1653, %v1795
      %v1830 = vadd.f32 %v1654, %v1800
      %v1831 = vadd.f32 %v1655, %v1805
      %v1832 = vadd.f32 %v1656, %v1810
      %v1833 = vadd.f32 %v1657, %v1815
      %1834 = vst.msk [vmem:[#allocation3] sm:$0xff] %vm454, %v1818
      %1835 = vst.msk [vmem:[#allocation3 + $0x8] sm:$0xff] %vm454, %v1819
      %1836 = vst.msk [vmem:[#allocation3 + $0x10] sm:$0xff] %vm454, %v1820
      %1837 = vst.msk [vmem:[#allocation3 + $0x18] sm:$0xff] %vm454, %v1821
      %1838 = vst.msk [vmem:[#allocation3 + $0x20] sm:$0xff] %vm454, %v1822
      %1839 = vst.msk [vmem:[#allocation3 + $0x28] sm:$0xff] %vm454, %v1823
      %1840 = vst.msk [vmem:[#allocation3 + $0x30] sm:$0xff] %vm454, %v1824
      %1841 = vst.msk [vmem:[#allocation3 + $0x38] sm:$0xff] %vm454, %v1825
      %1842 = vst.msk [vmem:[#allocation3 + $0x40] sm:$0xff] %vm454, %v1826
      %1843 = vst.msk [vmem:[#allocation3 + $0x48] sm:$0xff] %vm454, %v1827
      %1844 = vst.msk [vmem:[#allocation3 + $0x50] sm:$0xff] %vm454, %v1828
      %1845 = vst.msk [vmem:[#allocation3 + $0x58] sm:$0xff] %vm454, %v1829
      %1846 = vst.msk [vmem:[#allocation3 + $0x60] sm:$0xff] %vm454, %v1830
      %1847 = vst.msk [vmem:[#allocation3 + $0x68] sm:$0xff] %vm454, %v1831
      %1848 = vst.msk [vmem:[#allocation3 + $0x70] sm:$0xff] %vm454, %v1832
      %1849 = vst.msk [vmem:[#allocation3 + $0x78] sm:$0xff] %vm454, %v1833
      %v1850 = vld [vmem:[#allocation3] sm:$0xff]
      %v1851 = vld [vmem:[#allocation3 + $0x8] sm:$0xff]
      %v1852 = vld [vmem:[#allocation3 + $0x10] sm:$0xff]
      %v1853 = vld [vmem:[#allocation3 + $0x18] sm:$0xff]
      %v1854 = vld [vmem:[#allocation3 + $0x20] sm:$0xff]
      %v1855 = vld [vmem:[#allocation3 + $0x28] sm:$0xff]
      %v1856 = vld [vmem:[#allocation3 + $0x30] sm:$0xff]
      %v1857 = vld [vmem:[#allocation3 + $0x38] sm:$0xff]
      %v1858 = vld [vmem:[#allocation3 + $0x40] sm:$0xff]
      %v1859 = vld [vmem:[#allocation3 + $0x48] sm:$0xff]
      %v1860 = vld [vmem:[#allocation3 + $0x50] sm:$0xff]
      %v1861 = vld [vmem:[#allocation3 + $0x58] sm:$0xff]
      %v1862 = vld [vmem:[#allocation3 + $0x60] sm:$0xff]
      %v1863 = vld [vmem:[#allocation3 + $0x68] sm:$0xff]
      %v1864 = vld [vmem:[#allocation3 + $0x70] sm:$0xff]
      %v1865 = vld [vmem:[#allocation3 + $0x78] sm:$0xff]
      %s1866 = scalar_lea.vmem %s3, 8
      %v1867 = vld [vmem:[%s1866] sm:$0xf]
      %vm1868 = vcmask 1045504
      %v1869 = vrot.slane %v471, 2
      %v1870 = vrot.slane %v472, 2
      %v1871 = vsel %vm1868, %v1869, %v1870
      %v1872 = vrot.slane %v473, 2
      %v1873 = vsel %vm1868, %v1870, %v1872
      %v1874 = vrot.slane %v474, 2
      %v1875 = vrot.slane %v475, 2
      %v1876 = vsel %vm1868, %v1874, %v1875
      %v1877 = vrot.slane %v476, 2
      %v1878 = vsel %vm1868, %v1875, %v1877
      %v1879 = vrot.slane %v477, 2
      %v1880 = vrot.slane %v478, 2
      %v1881 = vsel %vm1868, %v1879, %v1880
      %v1882 = vrot.slane %v479, 2
      %v1883 = vsel %vm1868, %v1880, %v1882
      %v1884 = vrot.slane %v480, 2
      %v1885 = vrot.slane %v481, 2
      %v1886 = vsel %vm1868, %v1884, %v1885
      %v1887 = vrot.slane %v482, 2
      %v1888 = vsel %vm1868, %v1885, %v1887
      %v1889 = vrot.slane %v483, 2
      %v1890 = vrot.slane %v484, 2
      %v1891 = vsel %vm1868, %v1889, %v1890
      %v1892 = vrot.slane %v485, 2
      %v1893 = vsel %vm1868, %v1890, %v1892
      %v1894 = vrot.slane %v486, 2
      %v1895 = vrot.slane %v487, 2
      %v1896 = vsel %vm1868, %v1894, %v1895
      %v1897 = vrot.slane %v488, 2
      %v1898 = vsel %vm1868, %v1895, %v1897
      %v1899 = vrot.slane %v489, 2
      %v1900 = vrot.slane %v490, 2
      %v1901 = vsel %vm1868, %v1899, %v1900
      %v1902 = vrot.slane %v491, 2
      %v1903 = vsel %vm1868, %v1900, %v1902
      %v1904 = vrot.slane %v492, 2
      %v1905 = vrot.slane %v493, 2
      %v1906 = vsel %vm1868, %v1904, %v1905
      %v1907 = vrot.slane %v494, 2
      %v1908 = vsel %vm1868, %v1905, %v1907
      %v1909 = vsel %vm414, %v1871, 0
      %v1911 = vsel %vm414, %v1873, 0
      %v1913 = vsel %vm414, %v1876, 0
      %v1915 = vsel %vm414, %v1878, 0
      %v1917 = vsel %vm414, %v1881, 0
      %v1919 = vsel %vm414, %v1883, 0
      %v1921 = vsel %vm414, %v1886, 0
      %v1923 = vsel %vm414, %v1888, 0
      %v1925 = vsel %vm414, %v1891, 0
      %v1927 = vsel %vm414, %v1893, 0
      %v1929 = vsel %vm414, %v1896, 0
      %v1931 = vsel %vm414, %v1898, 0
      %v1933 = vsel %vm414, %v1901, 0
      %v1935 = vsel %vm414, %v1903, 0
      %v1937 = vsel %vm414, %v1906, 0
      %v1939 = vsel %vm414, %v1908, 0
      %v1942 = vsel %vm566, %v1867, 0
      %1944 = vmatprep.subr.mxu0 0.0
      %1945 = vmatpush1.msra.mxu0 0.0
      %1946 = vmatprep.subr.mxu0 0.0
      %1947 = vmatpush1.msra.mxu0 0.0
      %1948 = vmatprep.subr.mxu0 0.0
      %1949 = vmatpush1.msra.mxu0 0.0
      %1950 = vmatprep.subr.mxu0 0.0
      %1951 = vmatpush1.msra.mxu0 0.0
      %1952 = vmatprep.subr.mxu0 0.0
      %1953 = vmatpush1.msra.mxu0 0.0
      %1954 = vmatprep.subr.mxu0 0.0
      %1955 = vmatpush1.msra.mxu0 0.0
      %1956 = vmatprep.subr.mxu0 0.0
      %1957 = vmatpush1.msra.mxu0 0.0
      %1958 = vmatprep.subr.mxu0 0.0
      %1959 = vmatpush1.msra.mxu0 0.0
      %1960 = vmatprep.subr.mxu0 0.0
      %1961 = vmatpush1.msra.mxu0 0.0
      %1962 = vmatprep.subr.mxu0 0.0
      %1963 = vmatpush1.msra.mxu0 0.0
      %1964 = vmatprep.subr.mxu0 0.0
      %1965 = vmatpush1.msra.mxu0 0.0
      %1966 = vmatprep.subr.mxu0 0.0
      %1967 = vmatpush1.msra.mxu0 0.0
      %1968 = vmatprep.subr.mxu0 0.0
      %1969 = vmatpush1.msra.mxu0 0.0
      %1970 = vmatprep.subr.mxu0 0.0
      %1971 = vmatpush1.msra.mxu0 0.0
      %1972 = vmatprep.subr.mxu0 0.0
      %1973 = vmatpush1.msra.mxu0 0.0
      %1974 = vmatprep.subr.mxu0 0.0
      %1975 = vmatpush1.msra.mxu0 %v1942
      %1976 = vmatprep.subr.mxu0 0.0
      %1977 = vmatpush2.msra.mxu0 0.0
      %1978 = vmatprep.subr.mxu0 0.0
      %1979 = vmatpush2.msra.mxu0 0.0
      %1980 = vmatprep.subr.mxu0 0.0
      %1981 = vmatpush2.msra.mxu0 0.0
      %1982 = vmatprep.subr.mxu0 0.0
      %1983 = vmatpush2.msra.mxu0 0.0
      %1984 = vmatprep.subr.mxu0 0.0
      %1985 = vmatpush2.msra.mxu0 0.0
      %1986 = vmatprep.subr.mxu0 0.0
      %1987 = vmatpush2.msra.mxu0 0.0
      %1988 = vmatprep.subr.mxu0 0.0
      %1989 = vmatpush2.msra.mxu0 0.0
      %1990 = vmatprep.subr.mxu0 0.0
      %1991 = vmatpush2.msra.mxu0 0.0
      %1992 = vmatprep.subr.mxu0 0.0
      %1993 = vmatpush2.msra.mxu0 0.0
      %1994 = vmatprep.subr.mxu0 0.0
      %1995 = vmatpush2.msra.mxu0 0.0
      %1996 = vmatprep.subr.mxu0 0.0
      %1997 = vmatpush2.msra.mxu0 0.0
      %1998 = vmatprep.subr.mxu0 0.0
      %1999 = vmatpush2.msra.mxu0 0.0
      %2000 = vmatprep.subr.mxu0 0.0
      %2001 = vmatpush2.msra.mxu0 0.0
      %2002 = vmatprep.subr.mxu0 0.0
      %2003 = vmatpush2.msra.mxu0 0.0
      %2004 = vmatprep.subr.mxu0 0.0
      %2005 = vmatpush2.msra.mxu0 0.0
      %2006 = vmatprep.subr.mxu0 0.0
      %2007 = vmatpush2.msra.mxu0 0.0
      %2008 = vmatprep.mubr.f32.mxu0 0.0
      %2009 = vmatmul.mubr.f32.gmra.mxu0 %v1909
      %v2010 = vpop.f32.mrf.mxu0
      %v2011 = vadd.f32 0.0, %v2010
      %v2012 = vpop.f32.mrf.mxu0
      %2013 = vmatprep.mubr.f32.mxu0 0.0
      %2014 = vmatmul.mubr.f32.gmra.mxu0 %v1911
      %v2015 = vpop.f32.mrf.mxu0
      %v2016 = vadd.f32 0.0, %v2015
      %v2017 = vpop.f32.mrf.mxu0
      %2018 = vmatprep.mubr.f32.mxu0 0.0
      %2019 = vmatmul.mubr.f32.gmra.mxu0 %v1913
      %v2020 = vpop.f32.mrf.mxu0
      %v2021 = vadd.f32 0.0, %v2020
      %v2022 = vpop.f32.mrf.mxu0
      %2023 = vmatprep.mubr.f32.mxu0 0.0
      %2024 = vmatmul.mubr.f32.gmra.mxu0 %v1915
      %v2025 = vpop.f32.mrf.mxu0
      %v2026 = vadd.f32 0.0, %v2025
      %v2027 = vpop.f32.mrf.mxu0
      %2028 = vmatprep.mubr.f32.mxu0 0.0
      %2029 = vmatmul.mubr.f32.gmra.mxu0 %v1917
      %v2030 = vpop.f32.mrf.mxu0
      %v2031 = vadd.f32 0.0, %v2030
      %v2032 = vpop.f32.mrf.mxu0
      %2033 = vmatprep.mubr.f32.mxu0 0.0
      %2034 = vmatmul.mubr.f32.gmra.mxu0 %v1919
      %v2035 = vpop.f32.mrf.mxu0
      %v2036 = vadd.f32 0.0, %v2035
      %v2037 = vpop.f32.mrf.mxu0
      %2038 = vmatprep.mubr.f32.mxu0 0.0
      %2039 = vmatmul.mubr.f32.gmra.mxu0 %v1921
      %v2040 = vpop.f32.mrf.mxu0
      %v2041 = vadd.f32 0.0, %v2040
      %v2042 = vpop.f32.mrf.mxu0
      %2043 = vmatprep.mubr.f32.mxu0 0.0
      %2044 = vmatmul.mubr.f32.gmra.mxu0 %v1923
      %v2045 = vpop.f32.mrf.mxu0
      %v2046 = vadd.f32 0.0, %v2045
      %v2047 = vpop.f32.mrf.mxu0
      %2048 = vmatprep.mubr.f32.mxu0 0.0
      %2049 = vmatmul.mubr.f32.gmra.mxu0 %v1925
      %v2050 = vpop.f32.mrf.mxu0
      %v2051 = vadd.f32 0.0, %v2050
      %v2052 = vpop.f32.mrf.mxu0
      %2053 = vmatprep.mubr.f32.mxu0 0.0
      %2054 = vmatmul.mubr.f32.gmra.mxu0 %v1927
      %v2055 = vpop.f32.mrf.mxu0
      %v2056 = vadd.f32 0.0, %v2055
      %v2057 = vpop.f32.mrf.mxu0
      %2058 = vmatprep.mubr.f32.mxu0 0.0
      %2059 = vmatmul.mubr.f32.gmra.mxu0 %v1929
      %v2060 = vpop.f32.mrf.mxu0
      %v2061 = vadd.f32 0.0, %v2060
      %v2062 = vpop.f32.mrf.mxu0
      %2063 = vmatprep.mubr.f32.mxu0 0.0
      %2064 = vmatmul.mubr.f32.gmra.mxu0 %v1931
      %v2065 = vpop.f32.mrf.mxu0
      %v2066 = vadd.f32 0.0, %v2065
      %v2067 = vpop.f32.mrf.mxu0
      %2068 = vmatprep.mubr.f32.mxu0 0.0
      %2069 = vmatmul.mubr.f32.gmra.mxu0 %v1933
      %v2070 = vpop.f32.mrf.mxu0
      %v2071 = vadd.f32 0.0, %v2070
      %v2072 = vpop.f32.mrf.mxu0
      %2073 = vmatprep.mubr.f32.mxu0 0.0
      %2074 = vmatmul.mubr.f32.gmra.mxu0 %v1935
      %v2075 = vpop.f32.mrf.mxu0
      %v2076 = vadd.f32 0.0, %v2075
      %v2077 = vpop.f32.mrf.mxu0
      %2078 = vmatprep.mubr.f32.mxu0 0.0
      %2079 = vmatmul.mubr.f32.gmra.mxu0 %v1937
      %v2080 = vpop.f32.mrf.mxu0
      %v2081 = vadd.f32 0.0, %v2080
      %v2082 = vpop.f32.mrf.mxu0
      %2083 = vmatprep.mubr.f32.mxu0 0.0
      %2084 = vmatmul.mubr.f32.gmra.mxu0 %v1939
      %v2085 = vpop.f32.mrf.mxu0
      %v2086 = vadd.f32 0.0, %v2085
      %v2087 = vpop.f32.mrf.mxu0
      %2088 = vdwg.mxu0
      %v2089 = vadd.f32 %v1850, %v2011
      %v2090 = vadd.f32 %v1851, %v2016
      %v2091 = vadd.f32 %v1852, %v2021
      %v2092 = vadd.f32 %v1853, %v2026
      %v2093 = vadd.f32 %v1854, %v2031
      %v2094 = vadd.f32 %v1855, %v2036
      %v2095 = vadd.f32 %v1856, %v2041
      %v2096 = vadd.f32 %v1857, %v2046
      %v2097 = vadd.f32 %v1858, %v2051
      %v2098 = vadd.f32 %v1859, %v2056
      %v2099 = vadd.f32 %v1860, %v2061
      %v2100 = vadd.f32 %v1861, %v2066
      %v2101 = vadd.f32 %v1862, %v2071
      %v2102 = vadd.f32 %v1863, %v2076
      %v2103 = vadd.f32 %v1864, %v2081
      %v2104 = vadd.f32 %v1865, %v2086
      %2105 = vst.msk [vmem:[#allocation3] sm:$0xff] %vm454, %v2089
      %2106 = vst.msk [vmem:[#allocation3 + $0x8] sm:$0xff] %vm454, %v2090
      %2107 = vst.msk [vmem:[#allocation3 + $0x10] sm:$0xff] %vm454, %v2091
      %2108 = vst.msk [vmem:[#allocation3 + $0x18] sm:$0xff] %vm454, %v2092
      %2109 = vst.msk [vmem:[#allocation3 + $0x20] sm:$0xff] %vm454, %v2093
      %2110 = vst.msk [vmem:[#allocation3 + $0x28] sm:$0xff] %vm454, %v2094
      %2111 = vst.msk [vmem:[#allocation3 + $0x30] sm:$0xff] %vm454, %v2095
      %2112 = vst.msk [vmem:[#allocation3 + $0x38] sm:$0xff] %vm454, %v2096
      %2113 = vst.msk [vmem:[#allocation3 + $0x40] sm:$0xff] %vm454, %v2097
      %2114 = vst.msk [vmem:[#allocation3 + $0x48] sm:$0xff] %vm454, %v2098
      %2115 = vst.msk [vmem:[#allocation3 + $0x50] sm:$0xff] %vm454, %v2099
      %2116 = vst.msk [vmem:[#allocation3 + $0x58] sm:$0xff] %vm454, %v2100
      %2117 = vst.msk [vmem:[#allocation3 + $0x60] sm:$0xff] %vm454, %v2101
      %2118 = vst.msk [vmem:[#allocation3 + $0x68] sm:$0xff] %vm454, %v2102
      %2119 = vst.msk [vmem:[#allocation3 + $0x70] sm:$0xff] %vm454, %v2103
      %2120 = vst.msk [vmem:[#allocation3 + $0x78] sm:$0xff] %vm454, %v2104
      %v2121 = vld [vmem:[#allocation3] sm:$0xff]
      %v2122 = vld [vmem:[#allocation3 + $0x8] sm:$0xff]
      %v2123 = vld [vmem:[#allocation3 + $0x10] sm:$0xff]
      %v2124 = vld [vmem:[#allocation3 + $0x18] sm:$0xff]
      %v2125 = vld [vmem:[#allocation3 + $0x20] sm:$0xff]
      %v2126 = vld [vmem:[#allocation3 + $0x28] sm:$0xff]
      %v2127 = vld [vmem:[#allocation3 + $0x30] sm:$0xff]
      %v2128 = vld [vmem:[#allocation3 + $0x38] sm:$0xff]
      %v2129 = vld [vmem:[#allocation3 + $0x40] sm:$0xff]
      %v2130 = vld [vmem:[#allocation3 + $0x48] sm:$0xff]
      %v2131 = vld [vmem:[#allocation3 + $0x50] sm:$0xff]
      %v2132 = vld [vmem:[#allocation3 + $0x58] sm:$0xff]
      %v2133 = vld [vmem:[#allocation3 + $0x60] sm:$0xff]
      %v2134 = vld [vmem:[#allocation3 + $0x68] sm:$0xff]
      %v2135 = vld [vmem:[#allocation3 + $0x70] sm:$0xff]
      %v2136 = vld [vmem:[#allocation3 + $0x78] sm:$0xff]
      %s2137 = scalar_lea.vmem %s3, 20
      %v2138 = vld [vmem:[%s2137] sm:$0xf]
      %v2139 = vrot.slane %v495, 2
      %v2140 = vrot.slane %v496, 2
      %v2141 = vsel %vm1868, %v2139, %v2140
      %v2142 = vrot.slane %v497, 2
      %v2143 = vsel %vm1868, %v2140, %v2142
      %v2144 = vsel %vm414, %v2141, 0
      %v2146 = vsel %vm414, %v2143, 0
      %v2149 = vsel %vm566, %v2138, 0
      %2151 = vmatprep.subr.mxu0 0.0
      %2152 = vmatpush1.msra.mxu0 0.0
      %2153 = vmatprep.subr.mxu0 0.0
      %2154 = vmatpush1.msra.mxu0 0.0
      %2155 = vmatprep.subr.mxu0 0.0
      %2156 = vmatpush1.msra.mxu0 0.0
      %2157 = vmatprep.subr.mxu0 0.0
      %2158 = vmatpush1.msra.mxu0 0.0
      %2159 = vmatprep.subr.mxu0 0.0
      %2160 = vmatpush1.msra.mxu0 0.0
      %2161 = vmatprep.subr.mxu0 0.0
      %2162 = vmatpush1.msra.mxu0 0.0
      %2163 = vmatprep.subr.mxu0 0.0
      %2164 = vmatpush1.msra.mxu0 0.0
      %2165 = vmatprep.subr.mxu0 0.0
      %2166 = vmatpush1.msra.mxu0 0.0
      %2167 = vmatprep.subr.mxu0 0.0
      %2168 = vmatpush1.msra.mxu0 0.0
      %2169 = vmatprep.subr.mxu0 0.0
      %2170 = vmatpush1.msra.mxu0 0.0
      %2171 = vmatprep.subr.mxu0 0.0
      %2172 = vmatpush1.msra.mxu0 0.0
      %2173 = vmatprep.subr.mxu0 0.0
      %2174 = vmatpush1.msra.mxu0 0.0
      %2175 = vmatprep.subr.mxu0 0.0
      %2176 = vmatpush1.msra.mxu0 0.0
      %2177 = vmatprep.subr.mxu0 0.0
      %2178 = vmatpush1.msra.mxu0 0.0
      %2179 = vmatprep.subr.mxu0 0.0
      %2180 = vmatpush1.msra.mxu0 0.0
      %2181 = vmatprep.subr.mxu0 0.0
      %2182 = vmatpush1.msra.mxu0 %v2149
      %2183 = vmatprep.subr.mxu0 0.0
      %2184 = vmatpush2.msra.mxu0 0.0
      %2185 = vmatprep.subr.mxu0 0.0
      %2186 = vmatpush2.msra.mxu0 0.0
      %2187 = vmatprep.subr.mxu0 0.0
      %2188 = vmatpush2.msra.mxu0 0.0
      %2189 = vmatprep.subr.mxu0 0.0
      %2190 = vmatpush2.msra.mxu0 0.0
      %2191 = vmatprep.subr.mxu0 0.0
      %2192 = vmatpush2.msra.mxu0 0.0
      %2193 = vmatprep.subr.mxu0 0.0
      %2194 = vmatpush2.msra.mxu0 0.0
      %2195 = vmatprep.subr.mxu0 0.0
      %2196 = vmatpush2.msra.mxu0 0.0
      %2197 = vmatprep.subr.mxu0 0.0
      %2198 = vmatpush2.msra.mxu0 0.0
      %2199 = vmatprep.subr.mxu0 0.0
      %2200 = vmatpush2.msra.mxu0 0.0
      %2201 = vmatprep.subr.mxu0 0.0
      %2202 = vmatpush2.msra.mxu0 0.0
      %2203 = vmatprep.subr.mxu0 0.0
      %2204 = vmatpush2.msra.mxu0 0.0
      %2205 = vmatprep.subr.mxu0 0.0
      %2206 = vmatpush2.msra.mxu0 0.0
      %2207 = vmatprep.subr.mxu0 0.0
      %2208 = vmatpush2.msra.mxu0 0.0
      %2209 = vmatprep.subr.mxu0 0.0
      %2210 = vmatpush2.msra.mxu0 0.0
      %2211 = vmatprep.subr.mxu0 0.0
      %2212 = vmatpush2.msra.mxu0 0.0
      %2213 = vmatprep.subr.mxu0 0.0
      %2214 = vmatpush2.msra.mxu0 0.0
      %2215 = vmatprep.mubr.f32.mxu0 0.0
      %2216 = vmatmul.mubr.f32.gmra.mxu0 %v1913
      %v2217 = vpop.f32.mrf.mxu0
      %v2218 = vadd.f32 0.0, %v2217
      %v2219 = vpop.f32.mrf.mxu0
      %2220 = vmatprep.mubr.f32.mxu0 0.0
      %2221 = vmatmul.mubr.f32.gmra.mxu0 %v1915
      %v2222 = vpop.f32.mrf.mxu0
      %v2223 = vadd.f32 0.0, %v2222
      %v2224 = vpop.f32.mrf.mxu0
      %2225 = vmatprep.mubr.f32.mxu0 0.0
      %2226 = vmatmul.mubr.f32.gmra.mxu0 %v1917
      %v2227 = vpop.f32.mrf.mxu0
      %v2228 = vadd.f32 0.0, %v2227
      %v2229 = vpop.f32.mrf.mxu0
      %2230 = vmatprep.mubr.f32.mxu0 0.0
      %2231 = vmatmul.mubr.f32.gmra.mxu0 %v1919
      %v2232 = vpop.f32.mrf.mxu0
      %v2233 = vadd.f32 0.0, %v2232
      %v2234 = vpop.f32.mrf.mxu0
      %2235 = vmatprep.mubr.f32.mxu0 0.0
      %2236 = vmatmul.mubr.f32.gmra.mxu0 %v1921
      %v2237 = vpop.f32.mrf.mxu0
      %v2238 = vadd.f32 0.0, %v2237
      %v2239 = vpop.f32.mrf.mxu0
      %2240 = vmatprep.mubr.f32.mxu0 0.0
      %2241 = vmatmul.mubr.f32.gmra.mxu0 %v1923
      %v2242 = vpop.f32.mrf.mxu0
      %v2243 = vadd.f32 0.0, %v2242
      %v2244 = vpop.f32.mrf.mxu0
      %2245 = vmatprep.mubr.f32.mxu0 0.0
      %2246 = vmatmul.mubr.f32.gmra.mxu0 %v1925
      %v2247 = vpop.f32.mrf.mxu0
      %v2248 = vadd.f32 0.0, %v2247
      %v2249 = vpop.f32.mrf.mxu0
      %2250 = vmatprep.mubr.f32.mxu0 0.0
      %2251 = vmatmul.mubr.f32.gmra.mxu0 %v1927
      %v2252 = vpop.f32.mrf.mxu0
      %v2253 = vadd.f32 0.0, %v2252
      %v2254 = vpop.f32.mrf.mxu0
      %2255 = vmatprep.mubr.f32.mxu0 0.0
      %2256 = vmatmul.mubr.f32.gmra.mxu0 %v1929
      %v2257 = vpop.f32.mrf.mxu0
      %v2258 = vadd.f32 0.0, %v2257
      %v2259 = vpop.f32.mrf.mxu0
      %2260 = vmatprep.mubr.f32.mxu0 0.0
      %2261 = vmatmul.mubr.f32.gmra.mxu0 %v1931
      %v2262 = vpop.f32.mrf.mxu0
      %v2263 = vadd.f32 0.0, %v2262
      %v2264 = vpop.f32.mrf.mxu0
      %2265 = vmatprep.mubr.f32.mxu0 0.0
      %2266 = vmatmul.mubr.f32.gmra.mxu0 %v1933
      %v2267 = vpop.f32.mrf.mxu0
      %v2268 = vadd.f32 0.0, %v2267
      %v2269 = vpop.f32.mrf.mxu0
      %2270 = vmatprep.mubr.f32.mxu0 0.0
      %2271 = vmatmul.mubr.f32.gmra.mxu0 %v1935
      %v2272 = vpop.f32.mrf.mxu0
      %v2273 = vadd.f32 0.0, %v2272
      %v2274 = vpop.f32.mrf.mxu0
      %2275 = vmatprep.mubr.f32.mxu0 0.0
      %2276 = vmatmul.mubr.f32.gmra.mxu0 %v1937
      %v2277 = vpop.f32.mrf.mxu0
      %v2278 = vadd.f32 0.0, %v2277
      %v2279 = vpop.f32.mrf.mxu0
      %2280 = vmatprep.mubr.f32.mxu0 0.0
      %2281 = vmatmul.mubr.f32.gmra.mxu0 %v1939
      %v2282 = vpop.f32.mrf.mxu0
      %v2283 = vadd.f32 0.0, %v2282
      %v2284 = vpop.f32.mrf.mxu0
      %2285 = vmatprep.mubr.f32.mxu0 0.0
      %2286 = vmatmul.mubr.f32.gmra.mxu0 %v2144
      %v2287 = vpop.f32.mrf.mxu0
      %v2288 = vadd.f32 0.0, %v2287
      %v2289 = vpop.f32.mrf.mxu0
      %2290 = vmatprep.mubr.f32.mxu0 0.0
      %2291 = vmatmul.mubr.f32.gmra.mxu0 %v2146
      %v2292 = vpop.f32.mrf.mxu0
      %v2293 = vadd.f32 0.0, %v2292
      %v2294 = vpop.f32.mrf.mxu0
      %2295 = vdwg.mxu0
      %v2296 = vadd.f32 %v2121, %v2218
      %v2297 = vadd.f32 %v2122, %v2223
      %v2298 = vadd.f32 %v2123, %v2228
      %v2299 = vadd.f32 %v2124, %v2233
      %v2300 = vadd.f32 %v2125, %v2238
      %v2301 = vadd.f32 %v2126, %v2243
      %v2302 = vadd.f32 %v2127, %v2248
      %v2303 = vadd.f32 %v2128, %v2253
      %v2304 = vadd.f32 %v2129, %v2258
      %v2305 = vadd.f32 %v2130, %v2263
      %v2306 = vadd.f32 %v2131, %v2268
      %v2307 = vadd.f32 %v2132, %v2273
      %v2308 = vadd.f32 %v2133, %v2278
      %v2309 = vadd.f32 %v2134, %v2283
      %v2310 = vadd.f32 %v2135, %v2288
      %v2311 = vadd.f32 %v2136, %v2293
      %2312 = vst.msk [vmem:[#allocation3] sm:$0xff] %vm454, %v2296
      %2313 = vst.msk [vmem:[#allocation3 + $0x8] sm:$0xff] %vm454, %v2297
      %2314 = vst.msk [vmem:[#allocation3 + $0x10] sm:$0xff] %vm454, %v2298
      %2315 = vst.msk [vmem:[#allocation3 + $0x18] sm:$0xff] %vm454, %v2299
      %2316 = vst.msk [vmem:[#allocation3 + $0x20] sm:$0xff] %vm454, %v2300
      %2317 = vst.msk [vmem:[#allocation3 + $0x28] sm:$0xff] %vm454, %v2301
      %2318 = vst.msk [vmem:[#allocation3 + $0x30] sm:$0xff] %vm454, %v2302
      %2319 = vst.msk [vmem:[#allocation3 + $0x38] sm:$0xff] %vm454, %v2303
      %2320 = vst.msk [vmem:[#allocation3 + $0x40] sm:$0xff] %vm454, %v2304
      %2321 = vst.msk [vmem:[#allocation3 + $0x48] sm:$0xff] %vm454, %v2305
      %2322 = vst.msk [vmem:[#allocation3 + $0x50] sm:$0xff] %vm454, %v2306
      %2323 = vst.msk [vmem:[#allocation3 + $0x58] sm:$0xff] %vm454, %v2307
      %2324 = vst.msk [vmem:[#allocation3 + $0x60] sm:$0xff] %vm454, %v2308
      %2325 = vst.msk [vmem:[#allocation3 + $0x68] sm:$0xff] %vm454, %v2309
      %2326 = vst.msk [vmem:[#allocation3 + $0x70] sm:$0xff] %vm454, %v2310
      %2327 = vst.msk [vmem:[#allocation3 + $0x78] sm:$0xff] %vm454, %v2311
      %v2328 = vld [vmem:[#allocation3] sm:$0xff]
      %v2329 = vld [vmem:[#allocation3 + $0x8] sm:$0xff]
      %v2330 = vld [vmem:[#allocation3 + $0x10] sm:$0xff]
      %v2331 = vld [vmem:[#allocation3 + $0x18] sm:$0xff]
      %v2332 = vld [vmem:[#allocation3 + $0x20] sm:$0xff]
      %v2333 = vld [vmem:[#allocation3 + $0x28] sm:$0xff]
      %v2334 = vld [vmem:[#allocation3 + $0x30] sm:$0xff]
      %v2335 = vld [vmem:[#allocation3 + $0x38] sm:$0xff]
      %v2336 = vld [vmem:[#allocation3 + $0x40] sm:$0xff]
      %v2337 = vld [vmem:[#allocation3 + $0x48] sm:$0xff]
      %v2338 = vld [vmem:[#allocation3 + $0x50] sm:$0xff]
      %v2339 = vld [vmem:[#allocation3 + $0x58] sm:$0xff]
      %v2340 = vld [vmem:[#allocation3 + $0x60] sm:$0xff]
      %v2341 = vld [vmem:[#allocation3 + $0x68] sm:$0xff]
      %v2342 = vld [vmem:[#allocation3 + $0x70] sm:$0xff]
      %v2343 = vld [vmem:[#allocation3 + $0x78] sm:$0xff]
      %s2344 = scalar_lea.vmem %s3, 32
      %v2345 = vld [vmem:[%s2344] sm:$0xf]
      %v2346 = vrot.slane %v498, 2
      %v2347 = vrot.slane %v499, 2
      %v2348 = vsel %vm1868, %v2346, %v2347
      %v2349 = vrot.slane %v500, 2
      %v2350 = vsel %vm1868, %v2347, %v2349
      %v2351 = vsel %vm414, %v2348, 0
      %v2353 = vsel %vm414, %v2350, 0
      %v2356 = vsel %vm566, %v2345, 0
      %2358 = vmatprep.subr.mxu0 0.0
      %2359 = vmatpush1.msra.mxu0 0.0
      %2360 = vmatprep.subr.mxu0 0.0
      %2361 = vmatpush1.msra.mxu0 0.0
      %2362 = vmatprep.subr.mxu0 0.0
      %2363 = vmatpush1.msra.mxu0 0.0
      %2364 = vmatprep.subr.mxu0 0.0
      %2365 = vmatpush1.msra.mxu0 0.0
      %2366 = vmatprep.subr.mxu0 0.0
      %2367 = vmatpush1.msra.mxu0 0.0
      %2368 = vmatprep.subr.mxu0 0.0
      %2369 = vmatpush1.msra.mxu0 0.0
      %2370 = vmatprep.subr.mxu0 0.0
      %2371 = vmatpush1.msra.mxu0 0.0
      %2372 = vmatprep.subr.mxu0 0.0
      %2373 = vmatpush1.msra.mxu0 0.0
      %2374 = vmatprep.subr.mxu0 0.0
      %2375 = vmatpush1.msra.mxu0 0.0
      %2376 = vmatprep.subr.mxu0 0.0
      %2377 = vmatpush1.msra.mxu0 0.0
      %2378 = vmatprep.subr.mxu0 0.0
      %2379 = vmatpush1.msra.mxu0 0.0
      %2380 = vmatprep.subr.mxu0 0.0
      %2381 = vmatpush1.msra.mxu0 0.0
      %2382 = vmatprep.subr.mxu0 0.0
      %2383 = vmatpush1.msra.mxu0 0.0
      %2384 = vmatprep.subr.mxu0 0.0
      %2385 = vmatpush1.msra.mxu0 0.0
      %2386 = vmatprep.subr.mxu0 0.0
      %2387 = vmatpush1.msra.mxu0 0.0
      %2388 = vmatprep.subr.mxu0 0.0
      %2389 = vmatpush1.msra.mxu0 %v2356
      %2390 = vmatprep.subr.mxu0 0.0
      %2391 = vmatpush2.msra.mxu0 0.0
      %2392 = vmatprep.subr.mxu0 0.0
      %2393 = vmatpush2.msra.mxu0 0.0
      %2394 = vmatprep.subr.mxu0 0.0
      %2395 = vmatpush2.msra.mxu0 0.0
      %2396 = vmatprep.subr.mxu0 0.0
      %2397 = vmatpush2.msra.mxu0 0.0
      %2398 = vmatprep.subr.mxu0 0.0
      %2399 = vmatpush2.msra.mxu0 0.0
      %2400 = vmatprep.subr.mxu0 0.0
      %2401 = vmatpush2.msra.mxu0 0.0
      %2402 = vmatprep.subr.mxu0 0.0
      %2403 = vmatpush2.msra.mxu0 0.0
      %2404 = vmatprep.subr.mxu0 0.0
      %2405 = vmatpush2.msra.mxu0 0.0
      %2406 = vmatprep.subr.mxu0 0.0
      %2407 = vmatpush2.msra.mxu0 0.0
      %2408 = vmatprep.subr.mxu0 0.0
      %2409 = vmatpush2.msra.mxu0 0.0
      %2410 = vmatprep.subr.mxu0 0.0
      %2411 = vmatpush2.msra.mxu0 0.0
      %2412 = vmatprep.subr.mxu0 0.0
      %2413 = vmatpush2.msra.mxu0 0.0
      %2414 = vmatprep.subr.mxu0 0.0
      %2415 = vmatpush2.msra.mxu0 0.0
      %2416 = vmatprep.subr.mxu0 0.0
      %2417 = vmatpush2.msra.mxu0 0.0
      %2418 = vmatprep.subr.mxu0 0.0
      %2419 = vmatpush2.msra.mxu0 0.0
      %2420 = vmatprep.subr.mxu0 0.0
      %2421 = vmatpush2.msra.mxu0 0.0
      %2422 = vmatprep.mubr.f32.mxu0 0.0
      %2423 = vmatmul.mubr.f32.gmra.mxu0 %v1917
      %v2424 = vpop.f32.mrf.mxu0
      %v2425 = vadd.f32 0.0, %v2424
      %v2426 = vpop.f32.mrf.mxu0
      %2427 = vmatprep.mubr.f32.mxu0 0.0
      %2428 = vmatmul.mubr.f32.gmra.mxu0 %v1919
      %v2429 = vpop.f32.mrf.mxu0
      %v2430 = vadd.f32 0.0, %v2429
      %v2431 = vpop.f32.mrf.mxu0
      %2432 = vmatprep.mubr.f32.mxu0 0.0
      %2433 = vmatmul.mubr.f32.gmra.mxu0 %v1921
      %v2434 = vpop.f32.mrf.mxu0
      %v2435 = vadd.f32 0.0, %v2434
      %v2436 = vpop.f32.mrf.mxu0
      %2437 = vmatprep.mubr.f32.mxu0 0.0
      %2438 = vmatmul.mubr.f32.gmra.mxu0 %v1923
      %v2439 = vpop.f32.mrf.mxu0
      %v2440 = vadd.f32 0.0, %v2439
      %v2441 = vpop.f32.mrf.mxu0
      %2442 = vmatprep.mubr.f32.mxu0 0.0
      %2443 = vmatmul.mubr.f32.gmra.mxu0 %v1925
      %v2444 = vpop.f32.mrf.mxu0
      %v2445 = vadd.f32 0.0, %v2444
      %v2446 = vpop.f32.mrf.mxu0
      %2447 = vmatprep.mubr.f32.mxu0 0.0
      %2448 = vmatmul.mubr.f32.gmra.mxu0 %v1927
      %v2449 = vpop.f32.mrf.mxu0
      %v2450 = vadd.f32 0.0, %v2449
      %v2451 = vpop.f32.mrf.mxu0
      %2452 = vmatprep.mubr.f32.mxu0 0.0
      %2453 = vmatmul.mubr.f32.gmra.mxu0 %v1929
      %v2454 = vpop.f32.mrf.mxu0
      %v2455 = vadd.f32 0.0, %v2454
      %v2456 = vpop.f32.mrf.mxu0
      %2457 = vmatprep.mubr.f32.mxu0 0.0
      %2458 = vmatmul.mubr.f32.gmra.mxu0 %v1931
      %v2459 = vpop.f32.mrf.mxu0
      %v2460 = vadd.f32 0.0, %v2459
      %v2461 = vpop.f32.mrf.mxu0
      %2462 = vmatprep.mubr.f32.mxu0 0.0
      %2463 = vmatmul.mubr.f32.gmra.mxu0 %v1933
      %v2464 = vpop.f32.mrf.mxu0
      %v2465 = vadd.f32 0.0, %v2464
      %v2466 = vpop.f32.mrf.mxu0
      %2467 = vmatprep.mubr.f32.mxu0 0.0
      %2468 = vmatmul.mubr.f32.gmra.mxu0 %v1935
      %v2469 = vpop.f32.mrf.mxu0
      %v2470 = vadd.f32 0.0, %v2469
      %v2471 = vpop.f32.mrf.mxu0
      %2472 = vmatprep.mubr.f32.mxu0 0.0
      %2473 = vmatmul.mubr.f32.gmra.mxu0 %v1937
      %v2474 = vpop.f32.mrf.mxu0
      %v2475 = vadd.f32 0.0, %v2474
      %v2476 = vpop.f32.mrf.mxu0
      %2477 = vmatprep.mubr.f32.mxu0 0.0
      %2478 = vmatmul.mubr.f32.gmra.mxu0 %v1939
      %v2479 = vpop.f32.mrf.mxu0
      %v2480 = vadd.f32 0.0, %v2479
      %v2481 = vpop.f32.mrf.mxu0
      %2482 = vmatprep.mubr.f32.mxu0 0.0
      %2483 = vmatmul.mubr.f32.gmra.mxu0 %v2144
      %v2484 = vpop.f32.mrf.mxu0
      %v2485 = vadd.f32 0.0, %v2484
      %v2486 = vpop.f32.mrf.mxu0
      %2487 = vmatprep.mubr.f32.mxu0 0.0
      %2488 = vmatmul.mubr.f32.gmra.mxu0 %v2146
      %v2489 = vpop.f32.mrf.mxu0
      %v2490 = vadd.f32 0.0, %v2489
      %v2491 = vpop.f32.mrf.mxu0
      %2492 = vmatprep.mubr.f32.mxu0 0.0
      %2493 = vmatmul.mubr.f32.gmra.mxu0 %v2351
      %v2494 = vpop.f32.mrf.mxu0
      %v2495 = vadd.f32 0.0, %v2494
      %v2496 = vpop.f32.mrf.mxu0
      %2497 = vmatprep.mubr.f32.mxu0 0.0
      %2498 = vmatmul.mubr.f32.gmra.mxu0 %v2353
      %v2499 = vpop.f32.mrf.mxu0
      %v2500 = vadd.f32 0.0, %v2499
      %v2501 = vpop.f32.mrf.mxu0
      %2502 = vdwg.mxu0
      %v2503 = vadd.f32 %v2328, %v2425
      %v2504 = vadd.f32 %v2329, %v2430
      %v2505 = vadd.f32 %v2330, %v2435
      %v2506 = vadd.f32 %v2331, %v2440
      %v2507 = vadd.f32 %v2332, %v2445
      %v2508 = vadd.f32 %v2333, %v2450
      %v2509 = vadd.f32 %v2334, %v2455
      %v2510 = vadd.f32 %v2335, %v2460
      %v2511 = vadd.f32 %v2336, %v2465
      %v2512 = vadd.f32 %v2337, %v2470
      %v2513 = vadd.f32 %v2338, %v2475
      %v2514 = vadd.f32 %v2339, %v2480
      %v2515 = vadd.f32 %v2340, %v2485
      %v2516 = vadd.f32 %v2341, %v2490
      %v2517 = vadd.f32 %v2342, %v2495
      %v2518 = vadd.f32 %v2343, %v2500
      %2519 = vst.msk [vmem:[#allocation3] sm:$0xff] %vm454, %v2503
      %2520 = vst.msk [vmem:[#allocation3 + $0x8] sm:$0xff] %vm454, %v2504
      %2521 = vst.msk [vmem:[#allocation3 + $0x10] sm:$0xff] %vm454, %v2505
      %2522 = vst.msk [vmem:[#allocation3 + $0x18] sm:$0xff] %vm454, %v2506
      %2523 = vst.msk [vmem:[#allocation3 + $0x20] sm:$0xff] %vm454, %v2507
      %2524 = vst.msk [vmem:[#allocation3 + $0x28] sm:$0xff] %vm454, %v2508
      %2525 = vst.msk [vmem:[#allocation3 + $0x30] sm:$0xff] %vm454, %v2509
      %2526 = vst.msk [vmem:[#allocation3 + $0x38] sm:$0xff] %vm454, %v2510
      %2527 = vst.msk [vmem:[#allocation3 + $0x40] sm:$0xff] %vm454, %v2511
      %2528 = vst.msk [vmem:[#allocation3 + $0x48] sm:$0xff] %vm454, %v2512
      %2529 = vst.msk [vmem:[#allocation3 + $0x50] sm:$0xff] %vm454, %v2513
      %2530 = vst.msk [vmem:[#allocation3 + $0x58] sm:$0xff] %vm454, %v2514
      %2531 = vst.msk [vmem:[#allocation3 + $0x60] sm:$0xff] %vm454, %v2515
      %2532 = vst.msk [vmem:[#allocation3 + $0x68] sm:$0xff] %vm454, %v2516
      %2533 = vst.msk [vmem:[#allocation3 + $0x70] sm:$0xff] %vm454, %v2517
      %2534 = vst.msk [vmem:[#allocation3 + $0x78] sm:$0xff] %vm454, %v2518
      %v2535 = vld [vmem:[#allocation3] sm:$0xff]
      %v2536 = vld [vmem:[#allocation3 + $0x8] sm:$0xff]
      %v2537 = vld [vmem:[#allocation3 + $0x10] sm:$0xff]
      %v2538 = vld [vmem:[#allocation3 + $0x18] sm:$0xff]
      %v2539 = vld [vmem:[#allocation3 + $0x20] sm:$0xff]
      %v2540 = vld [vmem:[#allocation3 + $0x28] sm:$0xff]
      %v2541 = vld [vmem:[#allocation3 + $0x30] sm:$0xff]
      %v2542 = vld [vmem:[#allocation3 + $0x38] sm:$0xff]
      %v2543 = vld [vmem:[#allocation3 + $0x40] sm:$0xff]
      %v2544 = vld [vmem:[#allocation3 + $0x48] sm:$0xff]
      %v2545 = vld [vmem:[#allocation3 + $0x50] sm:$0xff]
      %v2546 = vld [vmem:[#allocation3 + $0x58] sm:$0xff]
      %v2547 = vld [vmem:[#allocation3 + $0x60] sm:$0xff]
      %v2548 = vld [vmem:[#allocation3 + $0x68] sm:$0xff]
      %v2549 = vld [vmem:[#allocation3 + $0x70] sm:$0xff]
      %v2550 = vld [vmem:[#allocation3 + $0x78] sm:$0xff]
      %v2551 = vld [vmem:[%s4] sm:$0x1]
      %v2553 = vlaneseq
      %v2554 = vshrl.u32 %v2553, 7
      %v2555 = vsub.s32 0, %v2554
      %v2556 = vrot.slane %v2551, %v2555
      %v2558 = vadd.f32 %v2535, %v2556
      %v2559 = vadd.f32 %v2536, %v2556
      %v2560 = vadd.f32 %v2537, %v2556
      %v2561 = vadd.f32 %v2538, %v2556
      %v2562 = vadd.f32 %v2539, %v2556
      %v2563 = vadd.f32 %v2540, %v2556
      %v2564 = vadd.f32 %v2541, %v2556
      %v2565 = vadd.f32 %v2542, %v2556
      %v2566 = vadd.f32 %v2543, %v2556
      %v2567 = vadd.f32 %v2544, %v2556
      %v2568 = vadd.f32 %v2545, %v2556
      %v2569 = vadd.f32 %v2546, %v2556
      %v2570 = vadd.f32 %v2547, %v2556
      %v2571 = vadd.f32 %v2548, %v2556
      %v2572 = vadd.f32 %v2549, %v2556
      %v2573 = vadd.f32 %v2550, %v2556
      %2574 = vst.msk [vmem:[%s388] sm:$0xff] %vm454, %v2558
      %2575 = vst.msk [vmem:[%s388 + $0x8] sm:$0xff] %vm454, %v2559
      %2576 = vst.msk [vmem:[%s388 + $0x10] sm:$0xff] %vm454, %v2560
      %2577 = vst.msk [vmem:[%s388 + $0x18] sm:$0xff] %vm454, %v2561
      %2578 = vst.msk [vmem:[%s388 + $0x20] sm:$0xff] %vm454, %v2562
      %2579 = vst.msk [vmem:[%s388 + $0x28] sm:$0xff] %vm454, %v2563
      %2580 = vst.msk [vmem:[%s388 + $0x30] sm:$0xff] %vm454, %v2564
      %2581 = vst.msk [vmem:[%s388 + $0x38] sm:$0xff] %vm454, %v2565
      %2582 = vst.msk [vmem:[%s388 + $0x40] sm:$0xff] %vm454, %v2566
      %2583 = vst.msk [vmem:[%s388 + $0x48] sm:$0xff] %vm454, %v2567
      %2584 = vst.msk [vmem:[%s388 + $0x50] sm:$0xff] %vm454, %v2568
      %2585 = vst.msk [vmem:[%s388 + $0x58] sm:$0xff] %vm454, %v2569
      %2586 = vst.msk [vmem:[%s388 + $0x60] sm:$0xff] %vm454, %v2570
      %2587 = vst.msk [vmem:[%s388 + $0x68] sm:$0xff] %vm454, %v2571
      %2588 = vst.msk [vmem:[%s388 + $0x70] sm:$0xff] %vm454, %v2572
      %2589 = vst.msk [vmem:[%s388 + $0x78] sm:$0xff] %vm454, %v2573
      %s2590 = smul.u32 8, %s21
      %p2591 = scmp.lt.s32.totalorder %s20, 1
      %s2592 = scalar_select %p2591, %s20, 1
      %p2593 = scmp.lt.s32.totalorder %s2590, 15
      %s2594 = scalar_select %p2593, %s2590, 15
      %s2595 = smul.addr %s2594, 2
      %s2596 = smul.addr %s2592, 32
      %s2597 = sadd.s32 %s2595, %s2596
      %s2598 = smul.addr %s2597, 8
      %s2599 = scalar_lea.vmem %s5, %s2598
      // Predicated region
      $region41: #{_conv3x3_bias.1} parent=39 // pred_check
        %p2600 = pneg %p182
      $region42: #{_conv3x3_bias.1} parent=39 // pred_check_branch
        %2602 = sbr.rel (%p2600) target = $region44
      $region43: #{_conv3x3_bias.1} parent=39 // pred_region
        %s2603 = smul.u32 8, %s21
      $region44: #{_conv3x3_bias.1} parent=39 // pred_fallthru
        _
    $region40: #{_conv3x3_bias.1} parent=5 // pred_fallthru
      _
    %p2604 = scmp.le.s32.totalorder 2, %s11
    // Predicated region
    $region45: #{_conv3x3_bias.1} parent=5 // pred_check
      %p2605 = pneg %p2604
    $region46: #{_conv3x3_bias.1} parent=5 // pred_check_branch
      %2607 = sbr.rel (%p2605) target = $region48
    $region47: #{_conv3x3_bias.1} parent=5 // pred_region
      %s2608 = ssub.s32 %s11, 2
      // Predicated region
      $region49: #{_conv3x3_bias.1} parent=47 // pred_check
        %p2609 = pneg %p188
      $region50: #{_conv3x3_bias.1} parent=47 // pred_check_branch
        %2611 = sbr.rel (%p2609) target = $region52
      $region51: #{_conv3x3_bias.1} parent=47 // pred_region
        %s2612 = smul.u32 8, %s23
        %p2613 = scmp.lt.s32.totalorder %s22, 1
        %s2614 = scalar_select %p2613, %s22, 1
        %p2615 = scmp.lt.s32.totalorder %s2612, 15
        %s2616 = scalar_select %p2615, %s2612, 15
        %s2617 = smul.addr %s2616, 2
        %s2618 = smul.addr %s2614, 32
        %s2619 = sadd.s32 %s2617, %s2618
        %s2620 = smul.addr %s2619, 8
        %s2621 = scalar_lea.vmem %s5, %s2620
      $region52: #{_conv3x3_bias.1} parent=47 // pred_fallthru
        _
    $region48: #{_conv3x3_bias.1} parent=5 // pred_fallthru
      _
  $region6: #{_conv3x3_bias.1} parent=0 // loop_footer
    %s15 = sadd.s32 1, %s11
  $region7: #{_conv3x3_bias.1} parent=0 // loop_footer_branch
    %10 = sbr.rel target = $region3
  $region8: #{_conv3x3_bias.1} parent=0 // loop_exit
    _

</llo_original>
